<compile_context>
chip_gen: v7x
topology: tpu7x:2x2x1
jax: 0.10.0
libtpu: 0.0.40
codegen_flags: <defaults>
</compile_context>

<pallas_src>
import numpy as np
import jax
import jax.numpy as jnp
from jax.experimental import pallas as pl
from jax.experimental.pallas import tpu as pltpu


def mtnn_kernel(xs_ref, xd_ref,
                w1_ref, b1_ref, w2_ref, b2_ref,
                wd_ref, bd_ref,
                wihf_ref, whhf_ref, bf_ref,
                wihb_ref, whhb_ref, bb_ref,
                nws_ref, nwf_ref, nwb_ref, nb_ref,
                out_ref):
    f32 = jnp.float32
    relu = lambda v: jnp.maximum(v, 0.0)

    B, T = out_ref.shape                       # output is (B, T), K == 1

    # ---------------- static path: fc_static1 -> ReLU -> fc_static2 -> ReLU --
    xs = xs_ref[...]
    h1 = relu(jnp.dot(xs, w1_ref[...], preferred_element_type=f32) + b1_ref[...])
    out_static = relu(jnp.dot(h1, w2_ref[...], preferred_element_type=f32)
                      + b2_ref[...])                               # (B, Hs)

    # static + bias contribution of the per-sample head (VPU mul + lane reduce)
    static_part = (jnp.sum(out_static * nws_ref[...], axis=-1, keepdims=True)
                   + nb_ref[...])                                  # (B, 1)

    # -------- dynamic projections, hoisted out of the recurrence (all T) -----
    # xd_ref is time-major 2-D: row t*B + b.
    od = relu(jnp.dot(xd_ref[...], wd_ref[...], preferred_element_type=f32)
              + bd_ref[...])                                       # (T*B, Hd)
    pre_f = jnp.dot(od, wihf_ref[...], preferred_element_type=f32) + bf_ref[...]
    pre_b = jnp.dot(od, wihb_ref[...], preferred_element_type=f32) + bb_ref[...]

    whhf = whhf_ref[...]
    whhb = whhb_ref[...]

    # -------- interleaved fwd/bwd ReLU-RNN recurrence (states stay in vregs) --
    fwd_states = [None] * T
    bwd_states = [None] * T
    hf = None
    hb = None
    for s in range(T):
        pf = pre_f[s * B:(s + 1) * B, :]                 # time s
        pb = pre_b[(T - 1 - s) * B:(T - s) * B, :]       # time T-1-s
        if s == 0:
            hf = relu(pf)                                # h_{-1} == 0
            hb = relu(pb)
        else:
            hf = relu(pf + jnp.dot(hf, whhf, preferred_element_type=f32))
            hb = relu(pb + jnp.dot(hb, whhb, preferred_element_type=f32))
        fwd_states[s] = hf
        bwd_states[T - 1 - s] = hb

    # -------- output head for all T at once (K == 1), single lane-dense store -
    nwf = nwf_ref[...]                                   # (B, Hd)
    nwb = nwb_ref[...]                                   # (B, Hd)
    cols = [jnp.sum(fwd_states[t] * nwf, axis=-1, keepdims=True)
            + jnp.sum(bwd_states[t] * nwb, axis=-1, keepdims=True)
            for t in range(T)]                           # T x (B, 1)
    dyn = jnp.concatenate(cols, axis=1)                  # (B, T)
    out_ref[...] = relu(static_part + dyn)               # final ReLU


def mtnn_forward(params, x_static, x_dynamic, neuron_order):
    B, T, Dd = x_dynamic.shape
    Hs = params["w1_t"].shape[1]
    Hd = params["wd_t"].shape[1]
    K = params["neuron_bias"].shape[-1]
    assert K == 1, "kernel output head is specialised to output_size == 1"

    # ---- per-sample head: gather, squeeze K, split into matching blocks -----
    nw = params["neuron_weights"][neuron_order][..., 0]      # (B, Hs + 2*Hd)
    nw_s = nw[:, :Hs]
    nw_f = nw[:, Hs:Hs + Hd]
    nw_b = nw[:, Hs + Hd:]
    nb = params["neuron_bias"][neuron_order][:, 0, :]        # (B, 1)

    # ---- fold the two RNN biases per direction ------------------------------
    bf = params["bihf"] + params["bhhf"]                     # (1, Hd)
    bb = params["bihb"] + params["bhhb"]                     # (1, Hd)

    # ---- time-major 2-D dynamic input (row = t*B + b) ------------------------
    xd_tm = jnp.transpose(x_dynamic, (1, 0, 2)).reshape(T * B, Dd)

    inputs = [
        x_static, xd_tm,
        params["w1_t"], params["b1"], params["w2_t"], params["b2"],
        params["wd_t"], params["bd"],
        params["wihf_t"], params["whhf_t"], bf,
        params["wihb_t"], params["whhb_t"], bb,
        nw_s, nw_f, nw_b, nb,
    ]

    out = pl.pallas_call(
        mtnn_kernel,
        out_shape=jax.ShapeDtypeStruct((B, T), jnp.float32),
        in_specs=[pl.BlockSpec(memory_space=pltpu.MemorySpace.VMEM)] * len(inputs),
        out_specs=pl.BlockSpec(memory_space=pltpu.MemorySpace.VMEM),
    )(*inputs)

    # mimic torch `.squeeze()` of the (B, T, 1) result (K already dropped)
    return jnp.squeeze(out)


def mtnn_reference(params, xs, xd, order):
    """Pure-JAX reference of the PyTorch forward (eval mode)."""
    relu = lambda v: jnp.maximum(v, 0.0)
    h1 = relu(xs @ params["w1_t"] + params["b1"])
    out_static = relu(h1 @ params["w2_t"] + params["b2"])
    od = relu(jnp.einsum("btd,dh->bth", xd, params["wd_t"]) + params["bd"])
    B, T, _ = xd.shape
    Hd = params["wd_t"].shape[1]

    hf = jnp.zeros((B, Hd), jnp.float32)
    fwd = []
    for t in range(T):
        hf = relu(od[:, t] @ params["wihf_t"] + params["bihf"]
                  + hf @ params["whhf_t"] + params["bhhf"])
        fwd.append(hf)
    hb = jnp.zeros((B, Hd), jnp.float32)
    bwd = [None] * T
    for t in range(T - 1, -1, -1):
        hb = relu(od[:, t] @ params["wihb_t"] + params["bihb"]
                  + hb @ params["whhb_t"] + params["bhhb"])
        bwd[t] = hb
    out_dyn = relu(jnp.concatenate(
        [jnp.stack(fwd, axis=1), jnp.stack(bwd, axis=1)], axis=2))
    out_static_t = jnp.tile(out_static[:, None, :], (1, T, 1))
    fin = jnp.concatenate([out_static_t, out_dyn], axis=2)
    nw = params["neuron_weights"][order]
    nb = params["neuron_bias"][order]
    out = jnp.einsum("btd,bdk->btk", fin, nw) + nb
    return relu(jnp.squeeze(out))


def init_params(key, Ds, Dd, Hs, Hd, K, n_neurons):
    """Deterministic PyTorch-style uniform(-1/sqrt(fan_in), 1/sqrt(fan_in)) init."""
    def u(k, shape, fan_in):
        b = 1.0 / np.sqrt(fan_in)
        return jax.random.uniform(k, shape, jnp.float32, -b, b)

    ks = jax.random.split(key, 18)
    D = Hs + 2 * Hd
    return {
        # stored pre-transposed: (in_features, out_features)
        "w1_t": u(ks[0], (Ds, Hs), Ds),   "b1": u(ks[1], (1, Hs), Ds),
        "w2_t": u(ks[2], (Hs, Hs), Hs),   "b2": u(ks[3], (1, Hs), Hs),
        "wd_t": u(ks[4], (Dd, Hd), Dd),   "bd": u(ks[5], (1, Hd), Dd),
        # bidirectional ReLU-RNN, layer 0 (forward / reverse)
        "wihf_t": u(ks[6], (Hd, Hd), Hd), "whhf_t": u(ks[7], (Hd, Hd), Hd),
        "bihf": u(ks[8], (1, Hd), Hd),    "bhhf": u(ks[9], (1, Hd), Hd),
        "wihb_t": u(ks[10], (Hd, Hd), Hd), "whhb_t": u(ks[11], (Hd, Hd), Hd),
        "bihb": u(ks[12], (1, Hd), Hd),   "bhhb": u(ks[13], (1, Hd), Hd),
        # per-neuron output heads
        "neuron_weights": u(ks[14], (n_neurons, D, K), D),
        "neuron_bias":    u(ks[15], (n_neurons, 1, K), D),
    }


if __name__ == "__main__":
    B, T = 4, 8
    Ds, Dd = 12, 8          # input_size_static, input_size_dynamic
    Hs, Hd = 32, 16         # hidden_dim_static, hidden_dim_dynamic
    K = 1                   # output_size
    n_neurons = 6

    key = jax.random.PRNGKey(0)
    kp, kxs, kxd, kord = jax.random.split(key, 4)
    params = init_params(kp, Ds, Dd, Hs, Hd, K, n_neurons)

    x_static = jax.random.normal(kxs, (B, Ds), jnp.float32)
    x_dynamic = jax.random.normal(kxd, (B, T, Dd), jnp.float32)
    neuron_order = jax.random.randint(kord, (B,), 0, n_neurons)

    out = mtnn_forward(params, x_static, x_dynamic, neuron_order)
    out = jax.block_until_ready(out)

    ref = mtnn_reference(params, x_static, x_dynamic, neuron_order)
    np.testing.assert_allclose(np.asarray(out), np.asarray(ref),
                               rtol=1e-2, atol=1e-2)
    print("KERNEL_OK")
</pallas_src>

<mosaic_0001>
module attributes {stable_mosaic.version = 11 : i64} {
  func.func @mtnn_kernel(%arg0: memref<4x12xf32, #tpu.memory_space<vmem>>, %arg1: memref<32x8xf32, #tpu.memory_space<vmem>>, %arg2: memref<12x32xf32, #tpu.memory_space<vmem>>, %arg3: memref<1x32xf32, #tpu.memory_space<vmem>>, %arg4: memref<32x32xf32, #tpu.memory_space<vmem>>, %arg5: memref<1x32xf32, #tpu.memory_space<vmem>>, %arg6: memref<8x16xf32, #tpu.memory_space<vmem>>, %arg7: memref<1x16xf32, #tpu.memory_space<vmem>>, %arg8: memref<16x16xf32, #tpu.memory_space<vmem>>, %arg9: memref<16x16xf32, #tpu.memory_space<vmem>>, %arg10: memref<1x16xf32, #tpu.memory_space<vmem>>, %arg11: memref<16x16xf32, #tpu.memory_space<vmem>>, %arg12: memref<16x16xf32, #tpu.memory_space<vmem>>, %arg13: memref<1x16xf32, #tpu.memory_space<vmem>>, %arg14: memref<4x32xf32, #tpu.memory_space<vmem>>, %arg15: memref<4x16xf32, #tpu.memory_space<vmem>>, %arg16: memref<4x16xf32, #tpu.memory_space<vmem>>, %arg17: memref<4x1xf32, #tpu.memory_space<vmem>>, %arg18: memref<4x8xf32, #tpu.memory_space<vmem>>) attributes {dimension_semantics = [], scalar_prefetch = 0 : i64, scratch_operands = 0 : i64, tpu.core_type = #tpu.core_type<tc>} {
    %c0 = arith.constant 0 : index
    %c0_0 = arith.constant 0 : index
    %0 = vector.load %arg0[%c0, %c0_0] : memref<4x12xf32, #tpu.memory_space<vmem>>, vector<4x12xf32>
    %c0_1 = arith.constant 0 : index
    %c0_2 = arith.constant 0 : index
    %1 = vector.load %arg2[%c0_1, %c0_2] : memref<12x32xf32, #tpu.memory_space<vmem>>, vector<12x32xf32>
    %cst = arith.constant dense<0.000000e+00> : vector<4x32xf32>
    %2 = tpu.matmul %0, %1, %cst {dimension_numbers = #tpu.dot_dimension_numbers<[1], [0], [0], [1], [0, 0, 1, 1], [], []>} : vector<4x12xf32>, vector<12x32xf32>, vector<4x32xf32> -> vector<4x32xf32>
    %c0_3 = arith.constant 0 : index
    %c0_4 = arith.constant 0 : index
    %3 = vector.load %arg3[%c0_3, %c0_4] : memref<1x32xf32, #tpu.memory_space<vmem>>, vector<1x32xf32>
    %4 = vector.broadcast %3 : vector<1x32xf32> to vector<4x32xf32>
    %5 = arith.addf %2, %4 : vector<4x32xf32>
    %cst_5 = arith.constant 0.000000e+00 : f32
    %6 = vector.broadcast %cst_5 : f32 to vector<4x32xf32>
    %7 = arith.maximumf %5, %6 : vector<4x32xf32>
    %c0_6 = arith.constant 0 : index
    %c0_7 = arith.constant 0 : index
    %8 = vector.load %arg4[%c0_6, %c0_7] : memref<32x32xf32, #tpu.memory_space<vmem>>, vector<32x32xf32>
    %cst_8 = arith.constant dense<0.000000e+00> : vector<4x32xf32>
    %9 = tpu.matmul %7, %8, %cst_8 {dimension_numbers = #tpu.dot_dimension_numbers<[1], [0], [0], [1], [0, 0, 1, 1], [], []>} : vector<4x32xf32>, vector<32x32xf32>, vector<4x32xf32> -> vector<4x32xf32>
    %c0_9 = arith.constant 0 : index
    %c0_10 = arith.constant 0 : index
    %10 = vector.load %arg5[%c0_9, %c0_10] : memref<1x32xf32, #tpu.memory_space<vmem>>, vector<1x32xf32>
    %11 = vector.broadcast %10 : vector<1x32xf32> to vector<4x32xf32>
    %12 = arith.addf %9, %11 : vector<4x32xf32>
    %cst_11 = arith.constant 0.000000e+00 : f32
    %13 = vector.broadcast %cst_11 : f32 to vector<4x32xf32>
    %14 = arith.maximumf %12, %13 : vector<4x32xf32>
    %c0_12 = arith.constant 0 : index
    %c0_13 = arith.constant 0 : index
    %15 = vector.load %arg14[%c0_12, %c0_13] : memref<4x32xf32, #tpu.memory_space<vmem>>, vector<4x32xf32>
    %16 = arith.mulf %14, %15 : vector<4x32xf32>
    %cst_14 = arith.constant dense<0.000000e+00> : vector<4xf32>
    %17 = vector.multi_reduction <add>, %16, %cst_14 [1] : vector<4x32xf32> to vector<4xf32>
    %18 = vector.shape_cast %17 : vector<4xf32> to vector<4x1xf32>
    %c0_15 = arith.constant 0 : index
    %c0_16 = arith.constant 0 : index
    %19 = vector.load %arg17[%c0_15, %c0_16] : memref<4x1xf32, #tpu.memory_space<vmem>>, vector<4x1xf32>
    %20 = arith.addf %18, %19 : vector<4x1xf32>
    %c0_17 = arith.constant 0 : index
    %c0_18 = arith.constant 0 : index
    %21 = vector.load %arg1[%c0_17, %c0_18] : memref<32x8xf32, #tpu.memory_space<vmem>>, vector<32x8xf32>
    %c0_19 = arith.constant 0 : index
    %c0_20 = arith.constant 0 : index
    %22 = vector.load %arg6[%c0_19, %c0_20] : memref<8x16xf32, #tpu.memory_space<vmem>>, vector<8x16xf32>
    %cst_21 = arith.constant dense<0.000000e+00> : vector<32x16xf32>
    %23 = tpu.matmul %21, %22, %cst_21 {dimension_numbers = #tpu.dot_dimension_numbers<[1], [0], [0], [1], [0, 0, 1, 1], [], []>} : vector<32x8xf32>, vector<8x16xf32>, vector<32x16xf32> -> vector<32x16xf32>
    %c0_22 = arith.constant 0 : index
    %c0_23 = arith.constant 0 : index
    %24 = vector.load %arg7[%c0_22, %c0_23] : memref<1x16xf32, #tpu.memory_space<vmem>>, vector<1x16xf32>
    %25 = vector.broadcast %24 : vector<1x16xf32> to vector<32x16xf32>
    %26 = arith.addf %23, %25 : vector<32x16xf32>
    %cst_24 = arith.constant 0.000000e+00 : f32
    %27 = vector.broadcast %cst_24 : f32 to vector<32x16xf32>
    %28 = arith.maximumf %26, %27 : vector<32x16xf32>
    %c0_25 = arith.constant 0 : index
    %c0_26 = arith.constant 0 : index
    %29 = vector.load %arg8[%c0_25, %c0_26] : memref<16x16xf32, #tpu.memory_space<vmem>>, vector<16x16xf32>
    %cst_27 = arith.constant dense<0.000000e+00> : vector<32x16xf32>
    %30 = tpu.matmul %28, %29, %cst_27 {dimension_numbers = #tpu.dot_dimension_numbers<[1], [0], [0], [1], [0, 0, 1, 1], [], []>} : vector<32x16xf32>, vector<16x16xf32>, vector<32x16xf32> -> vector<32x16xf32>
    %c0_28 = arith.constant 0 : index
    %c0_29 = arith.constant 0 : index
    %31 = vector.load %arg10[%c0_28, %c0_29] : memref<1x16xf32, #tpu.memory_space<vmem>>, vector<1x16xf32>
    %32 = vector.broadcast %31 : vector<1x16xf32> to vector<32x16xf32>
    %33 = arith.addf %30, %32 : vector<32x16xf32>
    %c0_30 = arith.constant 0 : index
    %c0_31 = arith.constant 0 : index
    %34 = vector.load %arg11[%c0_30, %c0_31] : memref<16x16xf32, #tpu.memory_space<vmem>>, vector<16x16xf32>
    %cst_32 = arith.constant dense<0.000000e+00> : vector<32x16xf32>
    %35 = tpu.matmul %28, %34, %cst_32 {dimension_numbers = #tpu.dot_dimension_numbers<[1], [0], [0], [1], [0, 0, 1, 1], [], []>} : vector<32x16xf32>, vector<16x16xf32>, vector<32x16xf32> -> vector<32x16xf32>
    %c0_33 = arith.constant 0 : index
    %c0_34 = arith.constant 0 : index
    %36 = vector.load %arg13[%c0_33, %c0_34] : memref<1x16xf32, #tpu.memory_space<vmem>>, vector<1x16xf32>
    %37 = vector.broadcast %36 : vector<1x16xf32> to vector<32x16xf32>
    %38 = arith.addf %35, %37 : vector<32x16xf32>
    %c0_35 = arith.constant 0 : index
    %c0_36 = arith.constant 0 : index
    %39 = vector.load %arg9[%c0_35, %c0_36] : memref<16x16xf32, #tpu.memory_space<vmem>>, vector<16x16xf32>
    %c0_37 = arith.constant 0 : index
    %c0_38 = arith.constant 0 : index
    %40 = vector.load %arg12[%c0_37, %c0_38] : memref<16x16xf32, #tpu.memory_space<vmem>>, vector<16x16xf32>
    %41 = vector.extract_strided_slice %33 {offsets = [0, 0], sizes = [4, 16], strides = [1, 1]} : vector<32x16xf32> to vector<4x16xf32>
    %42 = vector.extract_strided_slice %38 {offsets = [28, 0], sizes = [4, 16], strides = [1, 1]} : vector<32x16xf32> to vector<4x16xf32>
    %cst_39 = arith.constant 0.000000e+00 : f32
    %43 = vector.broadcast %cst_39 : f32 to vector<4x16xf32>
    %44 = arith.maximumf %41, %43 : vector<4x16xf32>
    %cst_40 = arith.constant 0.000000e+00 : f32
    %45 = vector.broadcast %cst_40 : f32 to vector<4x16xf32>
    %46 = arith.maximumf %42, %45 : vector<4x16xf32>
    %47 = vector.extract_strided_slice %33 {offsets = [4, 0], sizes = [4, 16], strides = [1, 1]} : vector<32x16xf32> to vector<4x16xf32>
    %48 = vector.extract_strided_slice %38 {offsets = [24, 0], sizes = [4, 16], strides = [1, 1]} : vector<32x16xf32> to vector<4x16xf32>
    %cst_41 = arith.constant dense<0.000000e+00> : vector<4x16xf32>
    %49 = tpu.matmul %44, %39, %cst_41 {dimension_numbers = #tpu.dot_dimension_numbers<[1], [0], [0], [1], [0, 0, 1, 1], [], []>} : vector<4x16xf32>, vector<16x16xf32>, vector<4x16xf32> -> vector<4x16xf32>
    %50 = arith.addf %47, %49 : vector<4x16xf32>
    %cst_42 = arith.constant 0.000000e+00 : f32
    %51 = vector.broadcast %cst_42 : f32 to vector<4x16xf32>
    %52 = arith.maximumf %50, %51 : vector<4x16xf32>
    %cst_43 = arith.constant dense<0.000000e+00> : vector<4x16xf32>
    %53 = tpu.matmul %46, %40, %cst_43 {dimension_numbers = #tpu.dot_dimension_numbers<[1], [0], [0], [1], [0, 0, 1, 1], [], []>} : vector<4x16xf32>, vector<16x16xf32>, vector<4x16xf32> -> vector<4x16xf32>
    %54 = arith.addf %48, %53 : vector<4x16xf32>
    %cst_44 = arith.constant 0.000000e+00 : f32
    %55 = vector.broadcast %cst_44 : f32 to vector<4x16xf32>
    %56 = arith.maximumf %54, %55 : vector<4x16xf32>
    %57 = vector.extract_strided_slice %33 {offsets = [8, 0], sizes = [4, 16], strides = [1, 1]} : vector<32x16xf32> to vector<4x16xf32>
    %58 = vector.extract_strided_slice %38 {offsets = [20, 0], sizes = [4, 16], strides = [1, 1]} : vector<32x16xf32> to vector<4x16xf32>
    %cst_45 = arith.constant dense<0.000000e+00> : vector<4x16xf32>
    %59 = tpu.matmul %52, %39, %cst_45 {dimension_numbers = #tpu.dot_dimension_numbers<[1], [0], [0], [1], [0, 0, 1, 1], [], []>} : vector<4x16xf32>, vector<16x16xf32>, vector<4x16xf32> -> vector<4x16xf32>
    %60 = arith.addf %57, %59 : vector<4x16xf32>
    %cst_46 = arith.constant 0.000000e+00 : f32
    %61 = vector.broadcast %cst_46 : f32 to vector<4x16xf32>
    %62 = arith.maximumf %60, %61 : vector<4x16xf32>
    %cst_47 = arith.constant dense<0.000000e+00> : vector<4x16xf32>
    %63 = tpu.matmul %56, %40, %cst_47 {dimension_numbers = #tpu.dot_dimension_numbers<[1], [0], [0], [1], [0, 0, 1, 1], [], []>} : vector<4x16xf32>, vector<16x16xf32>, vector<4x16xf32> -> vector<4x16xf32>
    %64 = arith.addf %58, %63 : vector<4x16xf32>
    %cst_48 = arith.constant 0.000000e+00 : f32
    %65 = vector.broadcast %cst_48 : f32 to vector<4x16xf32>
    %66 = arith.maximumf %64, %65 : vector<4x16xf32>
    %67 = vector.extract_strided_slice %33 {offsets = [12, 0], sizes = [4, 16], strides = [1, 1]} : vector<32x16xf32> to vector<4x16xf32>
    %68 = vector.extract_strided_slice %38 {offsets = [16, 0], sizes = [4, 16], strides = [1, 1]} : vector<32x16xf32> to vector<4x16xf32>
    %cst_49 = arith.constant dense<0.000000e+00> : vector<4x16xf32>
    %69 = tpu.matmul %62, %39, %cst_49 {dimension_numbers = #tpu.dot_dimension_numbers<[1], [0], [0], [1], [0, 0, 1, 1], [], []>} : vector<4x16xf32>, vector<16x16xf32>, vector<4x16xf32> -> vector<4x16xf32>
    %70 = arith.addf %67, %69 : vector<4x16xf32>
    %cst_50 = arith.constant 0.000000e+00 : f32
    %71 = vector.broadcast %cst_50 : f32 to vector<4x16xf32>
    %72 = arith.maximumf %70, %71 : vector<4x16xf32>
    %cst_51 = arith.constant dense<0.000000e+00> : vector<4x16xf32>
    %73 = tpu.matmul %66, %40, %cst_51 {dimension_numbers = #tpu.dot_dimension_numbers<[1], [0], [0], [1], [0, 0, 1, 1], [], []>} : vector<4x16xf32>, vector<16x16xf32>, vector<4x16xf32> -> vector<4x16xf32>
    %74 = arith.addf %68, %73 : vector<4x16xf32>
    %cst_52 = arith.constant 0.000000e+00 : f32
    %75 = vector.broadcast %cst_52 : f32 to vector<4x16xf32>
    %76 = arith.maximumf %74, %75 : vector<4x16xf32>
    %77 = vector.extract_strided_slice %33 {offsets = [16, 0], sizes = [4, 16], strides = [1, 1]} : vector<32x16xf32> to vector<4x16xf32>
    %78 = vector.extract_strided_slice %38 {offsets = [12, 0], sizes = [4, 16], strides = [1, 1]} : vector<32x16xf32> to vector<4x16xf32>
    %cst_53 = arith.constant dense<0.000000e+00> : vector<4x16xf32>
    %79 = tpu.matmul %72, %39, %cst_53 {dimension_numbers = #tpu.dot_dimension_numbers<[1], [0], [0], [1], [0, 0, 1, 1], [], []>} : vector<4x16xf32>, vector<16x16xf32>, vector<4x16xf32> -> vector<4x16xf32>
    %80 = arith.addf %77, %79 : vector<4x16xf32>
    %cst_54 = arith.constant 0.000000e+00 : f32
    %81 = vector.broadcast %cst_54 : f32 to vector<4x16xf32>
    %82 = arith.maximumf %80, %81 : vector<4x16xf32>
    %cst_55 = arith.constant dense<0.000000e+00> : vector<4x16xf32>
    %83 = tpu.matmul %76, %40, %cst_55 {dimension_numbers = #tpu.dot_dimension_numbers<[1], [0], [0], [1], [0, 0, 1, 1], [], []>} : vector<4x16xf32>, vector<16x16xf32>, vector<4x16xf32> -> vector<4x16xf32>
    %84 = arith.addf %78, %83 : vector<4x16xf32>
    %cst_56 = arith.constant 0.000000e+00 : f32
    %85 = vector.broadcast %cst_56 : f32 to vector<4x16xf32>
    %86 = arith.maximumf %84, %85 : vector<4x16xf32>
    %87 = vector.extract_strided_slice %33 {offsets = [20, 0], sizes = [4, 16], strides = [1, 1]} : vector<32x16xf32> to vector<4x16xf32>
    %88 = vector.extract_strided_slice %38 {offsets = [8, 0], sizes = [4, 16], strides = [1, 1]} : vector<32x16xf32> to vector<4x16xf32>
    %cst_57 = arith.constant dense<0.000000e+00> : vector<4x16xf32>
    %89 = tpu.matmul %82, %39, %cst_57 {dimension_numbers = #tpu.dot_dimension_numbers<[1], [0], [0], [1], [0, 0, 1, 1], [], []>} : vector<4x16xf32>, vector<16x16xf32>, vector<4x16xf32> -> vector<4x16xf32>
    %90 = arith.addf %87, %89 : vector<4x16xf32>
    %cst_58 = arith.constant 0.000000e+00 : f32
    %91 = vector.broadcast %cst_58 : f32 to vector<4x16xf32>
    %92 = arith.maximumf %90, %91 : vector<4x16xf32>
    %cst_59 = arith.constant dense<0.000000e+00> : vector<4x16xf32>
    %93 = tpu.matmul %86, %40, %cst_59 {dimension_numbers = #tpu.dot_dimension_numbers<[1], [0], [0], [1], [0, 0, 1, 1], [], []>} : vector<4x16xf32>, vector<16x16xf32>, vector<4x16xf32> -> vector<4x16xf32>
    %94 = arith.addf %88, %93 : vector<4x16xf32>
    %cst_60 = arith.constant 0.000000e+00 : f32
    %95 = vector.broadcast %cst_60 : f32 to vector<4x16xf32>
    %96 = arith.maximumf %94, %95 : vector<4x16xf32>
    %97 = vector.extract_strided_slice %33 {offsets = [24, 0], sizes = [4, 16], strides = [1, 1]} : vector<32x16xf32> to vector<4x16xf32>
    %98 = vector.extract_strided_slice %38 {offsets = [4, 0], sizes = [4, 16], strides = [1, 1]} : vector<32x16xf32> to vector<4x16xf32>
    %cst_61 = arith.constant dense<0.000000e+00> : vector<4x16xf32>
    %99 = tpu.matmul %92, %39, %cst_61 {dimension_numbers = #tpu.dot_dimension_numbers<[1], [0], [0], [1], [0, 0, 1, 1], [], []>} : vector<4x16xf32>, vector<16x16xf32>, vector<4x16xf32> -> vector<4x16xf32>
    %100 = arith.addf %97, %99 : vector<4x16xf32>
    %cst_62 = arith.constant 0.000000e+00 : f32
    %101 = vector.broadcast %cst_62 : f32 to vector<4x16xf32>
    %102 = arith.maximumf %100, %101 : vector<4x16xf32>
    %cst_63 = arith.constant dense<0.000000e+00> : vector<4x16xf32>
    %103 = tpu.matmul %96, %40, %cst_63 {dimension_numbers = #tpu.dot_dimension_numbers<[1], [0], [0], [1], [0, 0, 1, 1], [], []>} : vector<4x16xf32>, vector<16x16xf32>, vector<4x16xf32> -> vector<4x16xf32>
    %104 = arith.addf %98, %103 : vector<4x16xf32>
    %cst_64 = arith.constant 0.000000e+00 : f32
    %105 = vector.broadcast %cst_64 : f32 to vector<4x16xf32>
    %106 = arith.maximumf %104, %105 : vector<4x16xf32>
    %107 = vector.extract_strided_slice %33 {offsets = [28, 0], sizes = [4, 16], strides = [1, 1]} : vector<32x16xf32> to vector<4x16xf32>
    %108 = vector.extract_strided_slice %38 {offsets = [0, 0], sizes = [4, 16], strides = [1, 1]} : vector<32x16xf32> to vector<4x16xf32>
    %cst_65 = arith.constant dense<0.000000e+00> : vector<4x16xf32>
    %109 = tpu.matmul %102, %39, %cst_65 {dimension_numbers = #tpu.dot_dimension_numbers<[1], [0], [0], [1], [0, 0, 1, 1], [], []>} : vector<4x16xf32>, vector<16x16xf32>, vector<4x16xf32> -> vector<4x16xf32>
    %110 = arith.addf %107, %109 : vector<4x16xf32>
    %cst_66 = arith.constant 0.000000e+00 : f32
    %111 = vector.broadcast %cst_66 : f32 to vector<4x16xf32>
    %112 = arith.maximumf %110, %111 : vector<4x16xf32>
    %cst_67 = arith.constant dense<0.000000e+00> : vector<4x16xf32>
    %113 = tpu.matmul %106, %40, %cst_67 {dimension_numbers = #tpu.dot_dimension_numbers<[1], [0], [0], [1], [0, 0, 1, 1], [], []>} : vector<4x16xf32>, vector<16x16xf32>, vector<4x16xf32> -> vector<4x16xf32>
    %114 = arith.addf %108, %113 : vector<4x16xf32>
    %cst_68 = arith.constant 0.000000e+00 : f32
    %115 = vector.broadcast %cst_68 : f32 to vector<4x16xf32>
    %116 = arith.maximumf %114, %115 : vector<4x16xf32>
    %c0_69 = arith.constant 0 : index
    %c0_70 = arith.constant 0 : index
    %117 = vector.load %arg15[%c0_69, %c0_70] : memref<4x16xf32, #tpu.memory_space<vmem>>, vector<4x16xf32>
    %c0_71 = arith.constant 0 : index
    %c0_72 = arith.constant 0 : index
    %118 = vector.load %arg16[%c0_71, %c0_72] : memref<4x16xf32, #tpu.memory_space<vmem>>, vector<4x16xf32>
    %119 = arith.mulf %44, %117 : vector<4x16xf32>
    %cst_73 = arith.constant dense<0.000000e+00> : vector<4xf32>
    %120 = vector.multi_reduction <add>, %119, %cst_73 [1] : vector<4x16xf32> to vector<4xf32>
    %121 = vector.shape_cast %120 : vector<4xf32> to vector<4x1xf32>
    %122 = arith.mulf %116, %118 : vector<4x16xf32>
    %cst_74 = arith.constant dense<0.000000e+00> : vector<4xf32>
    %123 = vector.multi_reduction <add>, %122, %cst_74 [1] : vector<4x16xf32> to vector<4xf32>
    %124 = vector.shape_cast %123 : vector<4xf32> to vector<4x1xf32>
    %125 = arith.addf %121, %124 : vector<4x1xf32>
    %126 = arith.mulf %52, %117 : vector<4x16xf32>
    %cst_75 = arith.constant dense<0.000000e+00> : vector<4xf32>
    %127 = vector.multi_reduction <add>, %126, %cst_75 [1] : vector<4x16xf32> to vector<4xf32>
    %128 = vector.shape_cast %127 : vector<4xf32> to vector<4x1xf32>
    %129 = arith.mulf %106, %118 : vector<4x16xf32>
    %cst_76 = arith.constant dense<0.000000e+00> : vector<4xf32>
    %130 = vector.multi_reduction <add>, %129, %cst_76 [1] : vector<4x16xf32> to vector<4xf32>
    %131 = vector.shape_cast %130 : vector<4xf32> to vector<4x1xf32>
    %132 = arith.addf %128, %131 : vector<4x1xf32>
    %133 = arith.mulf %62, %117 : vector<4x16xf32>
    %cst_77 = arith.constant dense<0.000000e+00> : vector<4xf32>
    %134 = vector.multi_reduction <add>, %133, %cst_77 [1] : vector<4x16xf32> to vector<4xf32>
    %135 = vector.shape_cast %134 : vector<4xf32> to vector<4x1xf32>
    %136 = arith.mulf %96, %118 : vector<4x16xf32>
    %cst_78 = arith.constant dense<0.000000e+00> : vector<4xf32>
    %137 = vector.multi_reduction <add>, %136, %cst_78 [1] : vector<4x16xf32> to vector<4xf32>
    %138 = vector.shape_cast %137 : vector<4xf32> to vector<4x1xf32>
    %139 = arith.addf %135, %138 : vector<4x1xf32>
    %140 = arith.mulf %72, %117 : vector<4x16xf32>
    %cst_79 = arith.constant dense<0.000000e+00> : vector<4xf32>
    %141 = vector.multi_reduction <add>, %140, %cst_79 [1] : vector<4x16xf32> to vector<4xf32>
    %142 = vector.shape_cast %141 : vector<4xf32> to vector<4x1xf32>
    %143 = arith.mulf %86, %118 : vector<4x16xf32>
    %cst_80 = arith.constant dense<0.000000e+00> : vector<4xf32>
    %144 = vector.multi_reduction <add>, %143, %cst_80 [1] : vector<4x16xf32> to vector<4xf32>
    %145 = vector.shape_cast %144 : vector<4xf32> to vector<4x1xf32>
    %146 = arith.addf %142, %145 : vector<4x1xf32>
    %147 = arith.mulf %82, %117 : vector<4x16xf32>
    %cst_81 = arith.constant dense<0.000000e+00> : vector<4xf32>
    %148 = vector.multi_reduction <add>, %147, %cst_81 [1] : vector<4x16xf32> to vector<4xf32>
    %149 = vector.shape_cast %148 : vector<4xf32> to vector<4x1xf32>
    %150 = arith.mulf %76, %118 : vector<4x16xf32>
    %cst_82 = arith.constant dense<0.000000e+00> : vector<4xf32>
    %151 = vector.multi_reduction <add>, %150, %cst_82 [1] : vector<4x16xf32> to vector<4xf32>
    %152 = vector.shape_cast %151 : vector<4xf32> to vector<4x1xf32>
    %153 = arith.addf %149, %152 : vector<4x1xf32>
    %154 = arith.mulf %92, %117 : vector<4x16xf32>
    %cst_83 = arith.constant dense<0.000000e+00> : vector<4xf32>
    %155 = vector.multi_reduction <add>, %154, %cst_83 [1] : vector<4x16xf32> to vector<4xf32>
    %156 = vector.shape_cast %155 : vector<4xf32> to vector<4x1xf32>
    %157 = arith.mulf %66, %118 : vector<4x16xf32>
    %cst_84 = arith.constant dense<0.000000e+00> : vector<4xf32>
    %158 = vector.multi_reduction <add>, %157, %cst_84 [1] : vector<4x16xf32> to vector<4xf32>
    %159 = vector.shape_cast %158 : vector<4xf32> to vector<4x1xf32>
    %160 = arith.addf %156, %159 : vector<4x1xf32>
    %161 = arith.mulf %102, %117 : vector<4x16xf32>
    %cst_85 = arith.constant dense<0.000000e+00> : vector<4xf32>
    %162 = vector.multi_reduction <add>, %161, %cst_85 [1] : vector<4x16xf32> to vector<4xf32>
    %163 = vector.shape_cast %162 : vector<4xf32> to vector<4x1xf32>
    %164 = arith.mulf %56, %118 : vector<4x16xf32>
    %cst_86 = arith.constant dense<0.000000e+00> : vector<4xf32>
    %165 = vector.multi_reduction <add>, %164, %cst_86 [1] : vector<4x16xf32> to vector<4xf32>
    %166 = vector.shape_cast %165 : vector<4xf32> to vector<4x1xf32>
    %167 = arith.addf %163, %166 : vector<4x1xf32>
    %168 = arith.mulf %112, %117 : vector<4x16xf32>
    %cst_87 = arith.constant dense<0.000000e+00> : vector<4xf32>
    %169 = vector.multi_reduction <add>, %168, %cst_87 [1] : vector<4x16xf32> to vector<4xf32>
    %170 = vector.shape_cast %169 : vector<4xf32> to vector<4x1xf32>
    %171 = arith.mulf %46, %118 : vector<4x16xf32>
    %cst_88 = arith.constant dense<0.000000e+00> : vector<4xf32>
    %172 = vector.multi_reduction <add>, %171, %cst_88 [1] : vector<4x16xf32> to vector<4xf32>
    %173 = vector.shape_cast %172 : vector<4xf32> to vector<4x1xf32>
    %174 = arith.addf %170, %173 : vector<4x1xf32>
    %175 = tpu.concatenate %125, %132, %139, %146, %153, %160, %167, %174 in 1 : vector<4x1xf32>, vector<4x1xf32>, vector<4x1xf32>, vector<4x1xf32>, vector<4x1xf32>, vector<4x1xf32>, vector<4x1xf32>, vector<4x1xf32> -> vector<4x8xf32>
    %176 = vector.broadcast %20 : vector<4x1xf32> to vector<4x8xf32>
    %177 = arith.addf %176, %175 : vector<4x8xf32>
    %cst_89 = arith.constant 0.000000e+00 : f32
    %178 = vector.broadcast %cst_89 : f32 to vector<4x8xf32>
    %179 = arith.maximumf %177, %178 : vector<4x8xf32>
    %c0_90 = arith.constant 0 : index
    %c0_91 = arith.constant 0 : index
    %180 = vector.load %arg18[%c0_90, %c0_91] : memref<4x8xf32, #tpu.memory_space<vmem>>, vector<4x8xf32>
    tpu.vector_store %arg18[%c0_90, %c0_91], %179 {strides = array<i32>} : memref<4x8xf32, #tpu.memory_space<vmem>>, vector<4x8xf32>,
    return
  }
}

</mosaic_0001>

<llo_original>
// kernel: tpu_custom_call.1
$region0: #{tpu_custom_call.1}
  #allocation0 [shape = 'u32[]', space=smem, size = 0x4, offset = 0x4, fixed_abs, tag = 'smem constant byte address 0x4 - core index']
  #allocation1 [shape = 'u32[144,128]{1,0:T(1,128)}', space=vmem, size = 0x12000, scoped, tag = 'internal scratch']
  %s0 = inlined_call_operand.hbm [shape: f32[4,12], index: 0, kind: input, shape index: {}]
  %s1 = inlined_call_operand.vmem [shape: f32[32,8], index: 1, kind: input, shape index: {}]
  %s2 = inlined_call_operand.vmem [shape: f32[12,32], index: 2, kind: input, shape index: {}]
  %s3 = inlined_call_operand.vmem [shape: f32[1,32], index: 3, kind: input, shape index: {}]
  %s4 = inlined_call_operand.vmem [shape: f32[32,32], index: 4, kind: input, shape index: {}]
  %s5 = inlined_call_operand.vmem [shape: f32[1,32], index: 5, kind: input, shape index: {}]
  %s6 = inlined_call_operand.hbm [shape: f32[8,16], index: 6, kind: input, shape index: {}]
  %s7 = inlined_call_operand.hbm [shape: f32[1,16], index: 7, kind: input, shape index: {}]
  %s8 = inlined_call_operand.vmem [shape: f32[16,16], index: 8, kind: input, shape index: {}]
  %s9 = inlined_call_operand.hbm [shape: f32[16,16], index: 9, kind: input, shape index: {}]
  %s10 = inlined_call_operand.hbm [shape: f32[1,16], index: 10, kind: input, shape index: {}]
  %s11 = inlined_call_operand.vmem [shape: f32[16,16], index: 11, kind: input, shape index: {}]
  %s12 = inlined_call_operand.hbm [shape: f32[16,16], index: 12, kind: input, shape index: {}]
  %s13 = inlined_call_operand.hbm [shape: f32[1,16], index: 13, kind: input, shape index: {}]
  %s14 = inlined_call_operand.vmem [shape: f32[4,32], index: 14, kind: input, shape index: {}]
  %s15 = inlined_call_operand.vmem [shape: f32[4,16], index: 15, kind: input, shape index: {}]
  %s16 = inlined_call_operand.vmem [shape: f32[4,16], index: 16, kind: input, shape index: {}]
  %s17 = inlined_call_operand.vmem [shape: f32[4,1], index: 17, kind: input, shape index: {}]
  %s18 = inlined_call_operand.hbm [shape: f32[4,8], index: 18, kind: output, shape index: {}]
  %s19 = sld [smem:[#allocation0]]
  $region110: #{tpu_custom_call.1} parent=0
    _
  %s21 = ssub.s32 1, %s19
  %s22 = scalar_select 0, %s21, %s19
  $region1: #{tpu_custom_call.1} parent=0
    #allocation2 [shape = 'u8[2048]{0}', space=vmem, size = 0x800, scoped, tag = 'input window, operand 0, single buffered']
    #allocation3 [shape = 's32[1]{0}', space=sflag, size = 0x4, scoped, tag = 'scoped memory for tpu_custom_call.1']
    #allocation4 [shape = 's32[1]{0}', space=sflag, size = 0x4, scoped, tag = 'scoped memory for tpu_custom_call.1']
    #allocation5 [shape = 'u8[4096]{0}', space=vmem, size = 0x1000, scoped, tag = 'input window, operand 6, single buffered']
    #allocation6 [shape = 's32[1]{0}', space=sflag, size = 0x4, scoped, tag = 'scoped memory for tpu_custom_call.1']
    #allocation7 [shape = 'u8[512]{0}', space=vmem, size = 0x400, scoped, tag = 'input window, operand 7, single buffered']
    #allocation8 [shape = 'u8[8192]{0}', space=vmem, size = 0x2000, scoped, tag = 'input window, operand 9, single buffered']
    #allocation9 [shape = 's32[1]{0}', space=sflag, size = 0x4, scoped, tag = 'scoped memory for tpu_custom_call.1']
    #allocation10 [shape = 'u8[512]{0}', space=vmem, size = 0x400, scoped, tag = 'input window, operand 10, single buffered']
    #allocation11 [shape = 'u8[8192]{0}', space=vmem, size = 0x2000, scoped, tag = 'input window, operand 12, single buffered']
    #allocation12 [shape = 's32[1]{0}', space=sflag, size = 0x4, scoped, tag = 'scoped memory for tpu_custom_call.1']
    #allocation13 [shape = 'u8[512]{0}', space=vmem, size = 0x400, scoped, tag = 'input window, operand 13, single buffered']
    #allocation14 [shape = 'u8[2048]{0}', space=vmem, size = 0x800, scoped, tag = 'output window, operand 0, single buffered']
    %23 = vsyncpa [#allocation3], 0
    %24 = vsyncpa [#allocation6], 0
    %25 = vsyncpa [#allocation9], 0
    %26 = vsyncpa [#allocation12], 0
    %27 = vsyncpa [#allocation4], 0
    // Predicated region
    $region2: #{tpu_custom_call.1} parent=1 // pred_check
      _
    $region3: #{tpu_custom_call.1} parent=1 // pred_check_branch
      %29 = sbr.rel (0) target = $region5
    $region4: #{tpu_custom_call.1} parent=1 // pred_region
      %s31 = ssub.s32 64, 64
      %32 = vsyncadd [#allocation3], %s31
      %s34 = sshll.u32 [#allocation2], 4
      %s35 = int_to_ptr.vmem [resolvable:$true] %s34
      %37 = dma.hbm_to_vmem [thread:$0]  %s0, 64, %s35, [#allocation3]
    $region5: #{tpu_custom_call.1} parent=1 // pred_fallthru
      _
    // Predicated region
    $region6: #{tpu_custom_call.1} parent=1 // pred_check
      _
    $region7: #{tpu_custom_call.1} parent=1 // pred_check_branch
      %39 = sbr.rel (0) target = $region9
    $region8: #{tpu_custom_call.1} parent=1 // pred_region
      _
    $region9: #{tpu_custom_call.1} parent=1 // pred_fallthru
      _
    // Predicated region
    $region10: #{tpu_custom_call.1} parent=1 // pred_check
      _
    $region11: #{tpu_custom_call.1} parent=1 // pred_check_branch
      %41 = sbr.rel (0) target = $region13
    $region12: #{tpu_custom_call.1} parent=1 // pred_region
      _
    $region13: #{tpu_custom_call.1} parent=1 // pred_fallthru
      _
    // Predicated region
    $region14: #{tpu_custom_call.1} parent=1 // pred_check
      _
    $region15: #{tpu_custom_call.1} parent=1 // pred_check_branch
      %43 = sbr.rel (0) target = $region17
    $region16: #{tpu_custom_call.1} parent=1 // pred_region
      _
    $region17: #{tpu_custom_call.1} parent=1 // pred_fallthru
      _
    // Predicated region
    $region18: #{tpu_custom_call.1} parent=1 // pred_check
      _
    $region19: #{tpu_custom_call.1} parent=1 // pred_check_branch
      %45 = sbr.rel (0) target = $region21
    $region20: #{tpu_custom_call.1} parent=1 // pred_region
      _
    $region21: #{tpu_custom_call.1} parent=1 // pred_fallthru
      _
    // Predicated region
    $region22: #{tpu_custom_call.1} parent=1 // pred_check
      _
    $region23: #{tpu_custom_call.1} parent=1 // pred_check_branch
      %47 = sbr.rel (0) target = $region25
    $region24: #{tpu_custom_call.1} parent=1 // pred_region
      _
    $region25: #{tpu_custom_call.1} parent=1 // pred_fallthru
      _
    // Predicated region
    $region26: #{tpu_custom_call.1} parent=1 // pred_check
      _
    $region27: #{tpu_custom_call.1} parent=1 // pred_check_branch
      %49 = sbr.rel (0) target = $region29
    $region28: #{tpu_custom_call.1} parent=1 // pred_region
      %s51 = ssub.s32 128, 128
      %52 = vsyncadd [#allocation6], %s51
      %s54 = sshll.u32 [#allocation5], 4
      %s55 = int_to_ptr.vmem [resolvable:$true] %s54
      %57 = dma.hbm_to_vmem [thread:$0]  %s6, 128, %s55, [#allocation6]
    $region29: #{tpu_custom_call.1} parent=1 // pred_fallthru
      _
    // Predicated region
    $region30: #{tpu_custom_call.1} parent=1 // pred_check
      _
    $region31: #{tpu_custom_call.1} parent=1 // pred_check_branch
      %59 = sbr.rel (0) target = $region33
    $region32: #{tpu_custom_call.1} parent=1 // pred_region
      %s61 = ssub.s32 16, 16
      %62 = vsyncadd [#allocation6], %s61
      %s64 = sshll.u32 [#allocation7], 4
      %s65 = int_to_ptr.vmem [resolvable:$true] %s64
      %67 = dma.hbm_to_vmem [thread:$0]  %s7, 16, %s65, [#allocation6]
    $region33: #{tpu_custom_call.1} parent=1 // pred_fallthru
      _
    // Predicated region
    $region34: #{tpu_custom_call.1} parent=1 // pred_check
      _
    $region35: #{tpu_custom_call.1} parent=1 // pred_check_branch
      %69 = sbr.rel (0) target = $region37
    $region36: #{tpu_custom_call.1} parent=1 // pred_region
      _
    $region37: #{tpu_custom_call.1} parent=1 // pred_fallthru
      _
    // Predicated region
    $region38: #{tpu_custom_call.1} parent=1 // pred_check
      _
    $region39: #{tpu_custom_call.1} parent=1 // pred_check_branch
      %71 = sbr.rel (0) target = $region41
    $region40: #{tpu_custom_call.1} parent=1 // pred_region
      %s73 = ssub.s32 256, 256
      %74 = vsyncadd [#allocation9], %s73
      %s75 = sshll.u32 [#allocation8], 4
      %s76 = int_to_ptr.vmem [resolvable:$true] %s75
      %81 = dma.hbm_to_vmem [thread:$0]  %s9, 256, %s76, [#allocation9], 128, 128, 8
    $region41: #{tpu_custom_call.1} parent=1 // pred_fallthru
      _
    // Predicated region
    $region42: #{tpu_custom_call.1} parent=1 // pred_check
      _
    $region43: #{tpu_custom_call.1} parent=1 // pred_check_branch
      %83 = sbr.rel (0) target = $region45
    $region44: #{tpu_custom_call.1} parent=1 // pred_region
      %s85 = ssub.s32 16, 16
      %86 = vsyncadd [#allocation9], %s85
      %s88 = sshll.u32 [#allocation10], 4
      %s89 = int_to_ptr.vmem [resolvable:$true] %s88
      %91 = dma.hbm_to_vmem [thread:$0]  %s10, 16, %s89, [#allocation9]
    $region45: #{tpu_custom_call.1} parent=1 // pred_fallthru
      _
    // Predicated region
    $region46: #{tpu_custom_call.1} parent=1 // pred_check
      _
    $region47: #{tpu_custom_call.1} parent=1 // pred_check_branch
      %93 = sbr.rel (0) target = $region49
    $region48: #{tpu_custom_call.1} parent=1 // pred_region
      _
    $region49: #{tpu_custom_call.1} parent=1 // pred_fallthru
      _
    // Predicated region
    $region50: #{tpu_custom_call.1} parent=1 // pred_check
      _
    $region51: #{tpu_custom_call.1} parent=1 // pred_check_branch
      %95 = sbr.rel (0) target = $region53
    $region52: #{tpu_custom_call.1} parent=1 // pred_region
      %s97 = ssub.s32 256, 256
      %98 = vsyncadd [#allocation12], %s97
      %s99 = sshll.u32 [#allocation11], 4
      %s100 = int_to_ptr.vmem [resolvable:$true] %s99
      %105 = dma.hbm_to_vmem [thread:$0]  %s12, 256, %s100, [#allocation12], 128, 128, 8
    $region53: #{tpu_custom_call.1} parent=1 // pred_fallthru
      _
    // Predicated region
    $region54: #{tpu_custom_call.1} parent=1 // pred_check
      _
    $region55: #{tpu_custom_call.1} parent=1 // pred_check_branch
      %107 = sbr.rel (0) target = $region57
    $region56: #{tpu_custom_call.1} parent=1 // pred_region
      %s109 = ssub.s32 16, 16
      %110 = vsyncadd [#allocation12], %s109
      %s112 = sshll.u32 [#allocation13], 4
      %s113 = int_to_ptr.vmem [resolvable:$true] %s112
      %115 = dma.hbm_to_vmem [thread:$0]  %s13, 16, %s113, [#allocation12]
    $region57: #{tpu_custom_call.1} parent=1 // pred_fallthru
      _
    // Predicated region
    $region58: #{tpu_custom_call.1} parent=1 // pred_check
      _
    $region59: #{tpu_custom_call.1} parent=1 // pred_check_branch
      %117 = sbr.rel (0) target = $region61
    $region60: #{tpu_custom_call.1} parent=1 // pred_region
      _
    $region61: #{tpu_custom_call.1} parent=1 // pred_fallthru
      _
    // Predicated region
    $region62: #{tpu_custom_call.1} parent=1 // pred_check
      _
    $region63: #{tpu_custom_call.1} parent=1 // pred_check_branch
      %119 = sbr.rel (0) target = $region65
    $region64: #{tpu_custom_call.1} parent=1 // pred_region
      _
    $region65: #{tpu_custom_call.1} parent=1 // pred_fallthru
      _
    // Predicated region
    $region66: #{tpu_custom_call.1} parent=1 // pred_check
      _
    $region67: #{tpu_custom_call.1} parent=1 // pred_check_branch
      %121 = sbr.rel (0) target = $region69
    $region68: #{tpu_custom_call.1} parent=1 // pred_region
      _
    $region69: #{tpu_custom_call.1} parent=1 // pred_fallthru
      _
    // Predicated region
    $region70: #{tpu_custom_call.1} parent=1 // pred_check
      _
    $region71: #{tpu_custom_call.1} parent=1 // pred_check_branch
      %123 = sbr.rel (0) target = $region73
    $region72: #{tpu_custom_call.1} parent=1 // pred_region
      _
    $region73: #{tpu_custom_call.1} parent=1 // pred_fallthru
      _
    // Predicated region
    $region74: #{tpu_custom_call.1} parent=1 // pred_check
      _
    $region75: #{tpu_custom_call.1} parent=1 // pred_check_branch
      %125 = sbr.rel (0) target = $region77
    $region76: #{tpu_custom_call.1} parent=1 // pred_region
      %126 = dma.done [#allocation3], 64
    $region77: #{tpu_custom_call.1} parent=1 // pred_fallthru
      _
    // Predicated region
    $region78: #{tpu_custom_call.1} parent=1 // pred_check
      _
    $region79: #{tpu_custom_call.1} parent=1 // pred_check_branch
      %128 = sbr.rel (0) target = $region81
    $region80: #{tpu_custom_call.1} parent=1 // pred_region
      %129 = dma.done [#allocation6], 128
    $region81: #{tpu_custom_call.1} parent=1 // pred_fallthru
      _
    // Predicated region
    $region82: #{tpu_custom_call.1} parent=1 // pred_check
      _
    $region83: #{tpu_custom_call.1} parent=1 // pred_check_branch
      %131 = sbr.rel (0) target = $region85
    $region84: #{tpu_custom_call.1} parent=1 // pred_region
      %132 = dma.done [#allocation6], 16
    $region85: #{tpu_custom_call.1} parent=1 // pred_fallthru
      _
    // Predicated region
    $region86: #{tpu_custom_call.1} parent=1 // pred_check
      _
    $region87: #{tpu_custom_call.1} parent=1 // pred_check_branch
      %134 = sbr.rel (0) target = $region89
    $region88: #{tpu_custom_call.1} parent=1 // pred_region
      %135 = dma.done [#allocation9], 256
    $region89: #{tpu_custom_call.1} parent=1 // pred_fallthru
      _
    // Predicated region
    $region90: #{tpu_custom_call.1} parent=1 // pred_check
      _
    $region91: #{tpu_custom_call.1} parent=1 // pred_check_branch
      %137 = sbr.rel (0) target = $region93
    $region92: #{tpu_custom_call.1} parent=1 // pred_region
      %138 = dma.done [#allocation9], 16
    $region93: #{tpu_custom_call.1} parent=1 // pred_fallthru
      _
    // Predicated region
    $region94: #{tpu_custom_call.1} parent=1 // pred_check
      _
    $region95: #{tpu_custom_call.1} parent=1 // pred_check_branch
      %140 = sbr.rel (0) target = $region97
    $region96: #{tpu_custom_call.1} parent=1 // pred_region
      %141 = dma.done [#allocation12], 256
    $region97: #{tpu_custom_call.1} parent=1 // pred_fallthru
      _
    // Predicated region
    $region98: #{tpu_custom_call.1} parent=1 // pred_check
      _
    $region99: #{tpu_custom_call.1} parent=1 // pred_check_branch
      %143 = sbr.rel (0) target = $region101
    $region100: #{tpu_custom_call.1} parent=1 // pred_region
      %144 = dma.done [#allocation12], 16
    $region101: #{tpu_custom_call.1} parent=1 // pred_fallthru
      _
    %v145 = vld [vmem:[#allocation2] sm:$0xf]
    %v146 = vld [vmem:[%s2] sm:$0xff]
    %v147 = vld [vmem:[%s2 + $0x8] sm:$0xf]
    %v148 = vld [vmem:[%s3] sm:$0x1]
    %v150 = vlaneseq
    %v151 = vshrl.u32 %v150, 7
    %v152 = vsub.s32 0, %v151
    %v153 = vrot.slane %v148, %v152
    %vm155 = vcmask 97280
    %v157 = vsel %vm155, %v145, 0
    %vm159 = vcmask 1043456
    %v161 = vsel %vm159, %v147, 0
    %163 = vmatprep.subr.mxu0 0.0
    %164 = vmatpush1.msra.mxu0 %v146
    %165 = vmatprep.subr.mxu0 0.0
    %166 = vmatpush1.msra.mxu0 %v161
    %167 = vmatprep.subr.mxu0 0.0
    %168 = vmatpush1.msra.mxu0 0.0
    %169 = vmatprep.subr.mxu0 0.0
    %170 = vmatpush1.msra.mxu0 0.0
    %171 = vmatprep.subr.mxu0 0.0
    %172 = vmatpush1.msra.mxu0 0.0
    %173 = vmatprep.subr.mxu0 0.0
    %174 = vmatpush1.msra.mxu0 0.0
    %175 = vmatprep.subr.mxu0 0.0
    %176 = vmatpush1.msra.mxu0 0.0
    %177 = vmatprep.subr.mxu0 0.0
    %178 = vmatpush1.msra.mxu0 0.0
    %179 = vmatprep.subr.mxu0 0.0
    %180 = vmatpush1.msra.mxu0 0.0
    %181 = vmatprep.subr.mxu0 0.0
    %182 = vmatpush1.msra.mxu0 0.0
    %183 = vmatprep.subr.mxu0 0.0
    %184 = vmatpush1.msra.mxu0 0.0
    %185 = vmatprep.subr.mxu0 0.0
    %186 = vmatpush1.msra.mxu0 0.0
    %187 = vmatprep.subr.mxu0 0.0
    %188 = vmatpush1.msra.mxu0 0.0
    %189 = vmatprep.subr.mxu0 0.0
    %190 = vmatpush1.msra.mxu0 0.0
    %191 = vmatprep.subr.mxu0 0.0
    %192 = vmatpush1.msra.mxu0 0.0
    %193 = vmatprep.subr.mxu0 0.0
    %194 = vmatpush1.msra.mxu0 0.0
    %195 = vmatprep.subr.mxu0 0.0
    %196 = vmatpush1.msra.mxu0 0.0
    %197 = vmatprep.subr.mxu0 0.0
    %198 = vmatpush1.msra.mxu0 0.0
    %199 = vmatprep.subr.mxu0 0.0
    %200 = vmatpush1.msra.mxu0 0.0
    %201 = vmatprep.subr.mxu0 0.0
    %202 = vmatpush1.msra.mxu0 0.0
    %203 = vmatprep.subr.mxu0 0.0
    %204 = vmatpush1.msra.mxu0 0.0
    %205 = vmatprep.subr.mxu0 0.0
    %206 = vmatpush1.msra.mxu0 0.0
    %207 = vmatprep.subr.mxu0 0.0
    %208 = vmatpush1.msra.mxu0 0.0
    %209 = vmatprep.subr.mxu0 0.0
    %210 = vmatpush1.msra.mxu0 0.0
    %211 = vmatprep.subr.mxu0 0.0
    %212 = vmatpush1.msra.mxu0 0.0
    %213 = vmatprep.subr.mxu0 0.0
    %214 = vmatpush1.msra.mxu0 0.0
    %215 = vmatprep.subr.mxu0 0.0
    %216 = vmatpush1.msra.mxu0 0.0
    %217 = vmatprep.subr.mxu0 0.0
    %218 = vmatpush1.msra.mxu0 0.0
    %219 = vmatprep.subr.mxu0 0.0
    %220 = vmatpush1.msra.mxu0 0.0
    %221 = vmatprep.subr.mxu0 0.0
    %222 = vmatpush1.msra.mxu0 0.0
    %223 = vmatprep.subr.mxu0 0.0
    %224 = vmatpush1.msra.mxu0 0.0
    %225 = vmatprep.subr.mxu0 0.0
    %226 = vmatpush1.msra.mxu0 0.0
    %227 = vmatprep.mubr.f32.mxu0 0.0
    %228 = vmatmul.mubr.f32.gmra.mrb[0].mxu0 %v157
    %v229 = vpop.f32.mrb[0].mxu0
    %v230 = vadd.f32 %v153, %v229
    %v231 = vpop.f32.mrb[0].mxu0
    %232 = vdwg.mxu0
    %v233 = vmax.f32 %v230, 0.0
    %v234 = vld [vmem:[%s4] sm:$0xff]
    %v235 = vld [vmem:[%s4 + $0x8] sm:$0xff]
    %v236 = vld [vmem:[%s4 + $0x10] sm:$0xff]
    %v237 = vld [vmem:[%s4 + $0x18] sm:$0xff]
    %v238 = vld [vmem:[%s5] sm:$0x1]
    %v240 = vlaneseq
    %v241 = vshrl.u32 %v240, 7
    %v242 = vsub.s32 0, %v241
    %v243 = vrot.slane %v238, %v242
    %vm245 = vcmask 261120
    %v247 = vsel %vm245, %v233, 0
    %249 = vmatprep.subr.mxu0 0.0
    %250 = vmatpush1.msra.mxu0 %v234
    %251 = vmatprep.subr.mxu0 0.0
    %252 = vmatpush1.msra.mxu0 %v235
    %253 = vmatprep.subr.mxu0 0.0
    %254 = vmatpush1.msra.mxu0 %v236
    %255 = vmatprep.subr.mxu0 0.0
    %256 = vmatpush1.msra.mxu0 %v237
    %257 = vmatprep.subr.mxu0 0.0
    %258 = vmatpush1.msra.mxu0 0.0
    %259 = vmatprep.subr.mxu0 0.0
    %260 = vmatpush1.msra.mxu0 0.0
    %261 = vmatprep.subr.mxu0 0.0
    %262 = vmatpush1.msra.mxu0 0.0
    %263 = vmatprep.subr.mxu0 0.0
    %264 = vmatpush1.msra.mxu0 0.0
    %265 = vmatprep.subr.mxu0 0.0
    %266 = vmatpush1.msra.mxu0 0.0
    %267 = vmatprep.subr.mxu0 0.0
    %268 = vmatpush1.msra.mxu0 0.0
    %269 = vmatprep.subr.mxu0 0.0
    %270 = vmatpush1.msra.mxu0 0.0
    %271 = vmatprep.subr.mxu0 0.0
    %272 = vmatpush1.msra.mxu0 0.0
    %273 = vmatprep.subr.mxu0 0.0
    %274 = vmatpush1.msra.mxu0 0.0
    %275 = vmatprep.subr.mxu0 0.0
    %276 = vmatpush1.msra.mxu0 0.0
    %277 = vmatprep.subr.mxu0 0.0
    %278 = vmatpush1.msra.mxu0 0.0
    %279 = vmatprep.subr.mxu0 0.0
    %280 = vmatpush1.msra.mxu0 0.0
    %281 = vmatprep.subr.mxu0 0.0
    %282 = vmatpush1.msra.mxu0 0.0
    %283 = vmatprep.subr.mxu0 0.0
    %284 = vmatpush1.msra.mxu0 0.0
    %285 = vmatprep.subr.mxu0 0.0
    %286 = vmatpush1.msra.mxu0 0.0
    %287 = vmatprep.subr.mxu0 0.0
    %288 = vmatpush1.msra.mxu0 0.0
    %289 = vmatprep.subr.mxu0 0.0
    %290 = vmatpush1.msra.mxu0 0.0
    %291 = vmatprep.subr.mxu0 0.0
    %292 = vmatpush1.msra.mxu0 0.0
    %293 = vmatprep.subr.mxu0 0.0
    %294 = vmatpush1.msra.mxu0 0.0
    %295 = vmatprep.subr.mxu0 0.0
    %296 = vmatpush1.msra.mxu0 0.0
    %297 = vmatprep.subr.mxu0 0.0
    %298 = vmatpush1.msra.mxu0 0.0
    %299 = vmatprep.subr.mxu0 0.0
    %300 = vmatpush1.msra.mxu0 0.0
    %301 = vmatprep.subr.mxu0 0.0
    %302 = vmatpush1.msra.mxu0 0.0
    %303 = vmatprep.subr.mxu0 0.0
    %304 = vmatpush1.msra.mxu0 0.0
    %305 = vmatprep.subr.mxu0 0.0
    %306 = vmatpush1.msra.mxu0 0.0
    %307 = vmatprep.subr.mxu0 0.0
    %308 = vmatpush1.msra.mxu0 0.0
    %309 = vmatprep.subr.mxu0 0.0
    %310 = vmatpush1.msra.mxu0 0.0
    %311 = vmatprep.subr.mxu0 0.0
    %312 = vmatpush1.msra.mxu0 0.0
    %313 = vmatprep.mubr.f32.mxu0 0.0
    %314 = vmatmul.mubr.f32.gmra.mrb[0].mxu0 %v247
    %v315 = vpop.f32.mrb[0].mxu0
    %v316 = vadd.f32 %v243, %v315
    %v317 = vpop.f32.mrb[0].mxu0
    %318 = vdwg.mxu0
    %v319 = vmax.f32 %v316, 0.0
    %v320 = vld [vmem:[%s14] sm:$0xf]
    %v321 = vmul.f32 %v319, %v320
    %vm322 = vcmask 257024
    %v323 = vsel %vm322, %v321, 0.0
    %324 = vadd.xlane.f32.xlu0 %v323
    %v325 = vpop.xlane.xlu0 %324
    %v326 = vld [vmem:[%s17] sm:$0xf]
    %v327 = vadd.f32 %v325, %v326
    %v328 = vld [vmem:[%s1] sm:$0xff]
    %v329 = vld [vmem:[%s1 + $0x8] sm:$0xff]
    %v330 = vld [vmem:[%s1 + $0x10] sm:$0xff]
    %v331 = vld [vmem:[%s1 + $0x18] sm:$0xff]
    %v332 = vld [vmem:[#allocation5] sm:$0xff]
    %v333 = vld [vmem:[#allocation7] sm:$0x1]
    %v335 = vlaneseq
    %v336 = vshrl.u32 %v335, 7
    %v337 = vsub.s32 0, %v336
    %v338 = vrot.slane %v333, %v337
    %vm340 = vcmask 64512
    %v342 = vsel %vm340, %v328, 0
    %v345 = vsel %vm340, %v329, 0
    %v348 = vsel %vm340, %v330, 0
    %v351 = vsel %vm340, %v331, 0
    %353 = vmatprep.subr.mxu0 0.0
    %354 = vmatpush1.msra.mxu0 %v332
    %355 = vmatprep.subr.mxu0 0.0
    %356 = vmatpush1.msra.mxu0 0.0
    %357 = vmatprep.subr.mxu0 0.0
    %358 = vmatpush1.msra.mxu0 0.0
    %359 = vmatprep.subr.mxu0 0.0
    %360 = vmatpush1.msra.mxu0 0.0
    %361 = vmatprep.subr.mxu0 0.0
    %362 = vmatpush1.msra.mxu0 0.0
    %363 = vmatprep.subr.mxu0 0.0
    %364 = vmatpush1.msra.mxu0 0.0
    %365 = vmatprep.subr.mxu0 0.0
    %366 = vmatpush1.msra.mxu0 0.0
    %367 = vmatprep.subr.mxu0 0.0
    %368 = vmatpush1.msra.mxu0 0.0
    %369 = vmatprep.subr.mxu0 0.0
    %370 = vmatpush1.msra.mxu0 0.0
    %371 = vmatprep.subr.mxu0 0.0
    %372 = vmatpush1.msra.mxu0 0.0
    %373 = vmatprep.subr.mxu0 0.0
    %374 = vmatpush1.msra.mxu0 0.0
    %375 = vmatprep.subr.mxu0 0.0
    %376 = vmatpush1.msra.mxu0 0.0
    %377 = vmatprep.subr.mxu0 0.0
    %378 = vmatpush1.msra.mxu0 0.0
    %379 = vmatprep.subr.mxu0 0.0
    %380 = vmatpush1.msra.mxu0 0.0
    %381 = vmatprep.subr.mxu0 0.0
    %382 = vmatpush1.msra.mxu0 0.0
    %383 = vmatprep.subr.mxu0 0.0
    %384 = vmatpush1.msra.mxu0 0.0
    %385 = vmatprep.subr.mxu0 0.0
    %386 = vmatpush1.msra.mxu0 0.0
    %387 = vmatprep.subr.mxu0 0.0
    %388 = vmatpush1.msra.mxu0 0.0
    %389 = vmatprep.subr.mxu0 0.0
    %390 = vmatpush1.msra.mxu0 0.0
    %391 = vmatprep.subr.mxu0 0.0
    %392 = vmatpush1.msra.mxu0 0.0
    %393 = vmatprep.subr.mxu0 0.0
    %394 = vmatpush1.msra.mxu0 0.0
    %395 = vmatprep.subr.mxu0 0.0
    %396 = vmatpush1.msra.mxu0 0.0
    %397 = vmatprep.subr.mxu0 0.0
    %398 = vmatpush1.msra.mxu0 0.0
    %399 = vmatprep.subr.mxu0 0.0
    %400 = vmatpush1.msra.mxu0 0.0
    %401 = vmatprep.subr.mxu0 0.0
    %402 = vmatpush1.msra.mxu0 0.0
    %403 = vmatprep.subr.mxu0 0.0
    %404 = vmatpush1.msra.mxu0 0.0
    %405 = vmatprep.subr.mxu0 0.0
    %406 = vmatpush1.msra.mxu0 0.0
    %407 = vmatprep.subr.mxu0 0.0
    %408 = vmatpush1.msra.mxu0 0.0
    %409 = vmatprep.subr.mxu0 0.0
    %410 = vmatpush1.msra.mxu0 0.0
    %411 = vmatprep.subr.mxu0 0.0
    %412 = vmatpush1.msra.mxu0 0.0
    %413 = vmatprep.subr.mxu0 0.0
    %414 = vmatpush1.msra.mxu0 0.0
    %415 = vmatprep.subr.mxu0 0.0
    %416 = vmatpush1.msra.mxu0 0.0
    %417 = vmatprep.mubr.f32.mxu0 0.0
    %418 = vmatmul.mubr.f32.gmra.mrb[0].mxu0 %v342
    %v419 = vpop.f32.mrb[0].mxu0
    %v420 = vadd.f32 %v338, %v419
    %v421 = vpop.f32.mrb[0].mxu0
    %422 = vmatprep.mubr.f32.mxu0 0.0
    %423 = vmatmul.mubr.f32.gmra.mrb[0].mxu0 %v345
    %v424 = vpop.f32.mrb[0].mxu0
    %v425 = vadd.f32 %v338, %v424
    %v426 = vpop.f32.mrb[0].mxu0
    %427 = vmatprep.mubr.f32.mxu0 0.0
    %428 = vmatmul.mubr.f32.gmra.mrb[0].mxu0 %v348
    %v429 = vpop.f32.mrb[0].mxu0
    %v430 = vadd.f32 %v338, %v429
    %v431 = vpop.f32.mrb[0].mxu0
    %432 = vmatprep.mubr.f32.mxu0 0.0
    %433 = vmatmul.mubr.f32.gmra.mrb[0].mxu0 %v351
    %v434 = vpop.f32.mrb[0].mxu0
    %v435 = vadd.f32 %v338, %v434
    %v436 = vpop.f32.mrb[0].mxu0
    %437 = vdwg.mxu0
    %v438 = vmax.f32 %v420, 0.0
    %v439 = vmax.f32 %v425, 0.0
    %v440 = vmax.f32 %v430, 0.0
    %v441 = vmax.f32 %v435, 0.0
    %v442 = vld [vmem:[%s8] sm:$0xff]
    %v443 = vld [vmem:[%s8 + $0x8] sm:$0xff]
    %v444 = vld [vmem:[#allocation10] sm:$0x1]
    %v446 = vlaneseq
    %v447 = vshrl.u32 %v446, 7
    %v448 = vsub.s32 0, %v447
    %v449 = vrot.slane %v444, %v448
    %vm451 = vcmask 130048
    %v453 = vsel %vm451, %v438, 0
    %v456 = vsel %vm451, %v439, 0
    %v459 = vsel %vm451, %v440, 0
    %v462 = vsel %vm451, %v441, 0
    %464 = vmatprep.subr.mxu0 0.0
    %465 = vmatpush1.msra.mxu0 %v442
    %466 = vmatprep.subr.mxu0 0.0
    %467 = vmatpush1.msra.mxu0 %v443
    %468 = vmatprep.subr.mxu0 0.0
    %469 = vmatpush1.msra.mxu0 0.0
    %470 = vmatprep.subr.mxu0 0.0
    %471 = vmatpush1.msra.mxu0 0.0
    %472 = vmatprep.subr.mxu0 0.0
    %473 = vmatpush1.msra.mxu0 0.0
    %474 = vmatprep.subr.mxu0 0.0
    %475 = vmatpush1.msra.mxu0 0.0
    %476 = vmatprep.subr.mxu0 0.0
    %477 = vmatpush1.msra.mxu0 0.0
    %478 = vmatprep.subr.mxu0 0.0
    %479 = vmatpush1.msra.mxu0 0.0
    %480 = vmatprep.subr.mxu0 0.0
    %481 = vmatpush1.msra.mxu0 0.0
    %482 = vmatprep.subr.mxu0 0.0
    %483 = vmatpush1.msra.mxu0 0.0
    %484 = vmatprep.subr.mxu0 0.0
    %485 = vmatpush1.msra.mxu0 0.0
    %486 = vmatprep.subr.mxu0 0.0
    %487 = vmatpush1.msra.mxu0 0.0
    %488 = vmatprep.subr.mxu0 0.0
    %489 = vmatpush1.msra.mxu0 0.0
    %490 = vmatprep.subr.mxu0 0.0
    %491 = vmatpush1.msra.mxu0 0.0
    %492 = vmatprep.subr.mxu0 0.0
    %493 = vmatpush1.msra.mxu0 0.0
    %494 = vmatprep.subr.mxu0 0.0
    %495 = vmatpush1.msra.mxu0 0.0
    %496 = vmatprep.subr.mxu0 0.0
    %497 = vmatpush1.msra.mxu0 0.0
    %498 = vmatprep.subr.mxu0 0.0
    %499 = vmatpush1.msra.mxu0 0.0
    %500 = vmatprep.subr.mxu0 0.0
    %501 = vmatpush1.msra.mxu0 0.0
    %502 = vmatprep.subr.mxu0 0.0
    %503 = vmatpush1.msra.mxu0 0.0
    %504 = vmatprep.subr.mxu0 0.0
    %505 = vmatpush1.msra.mxu0 0.0
    %506 = vmatprep.subr.mxu0 0.0
    %507 = vmatpush1.msra.mxu0 0.0
    %508 = vmatprep.subr.mxu0 0.0
    %509 = vmatpush1.msra.mxu0 0.0
    %510 = vmatprep.subr.mxu0 0.0
    %511 = vmatpush1.msra.mxu0 0.0
    %512 = vmatprep.subr.mxu0 0.0
    %513 = vmatpush1.msra.mxu0 0.0
    %514 = vmatprep.subr.mxu0 0.0
    %515 = vmatpush1.msra.mxu0 0.0
    %516 = vmatprep.subr.mxu0 0.0
    %517 = vmatpush1.msra.mxu0 0.0
    %518 = vmatprep.subr.mxu0 0.0
    %519 = vmatpush1.msra.mxu0 0.0
    %520 = vmatprep.subr.mxu0 0.0
    %521 = vmatpush1.msra.mxu0 0.0
    %522 = vmatprep.subr.mxu0 0.0
    %523 = vmatpush1.msra.mxu0 0.0
    %524 = vmatprep.subr.mxu0 0.0
    %525 = vmatpush1.msra.mxu0 0.0
    %526 = vmatprep.subr.mxu0 0.0
    %527 = vmatpush1.msra.mxu0 0.0
    %528 = vmatprep.mubr.f32.mxu0 0.0
    %529 = vmatmul.mubr.f32.gmra.mrb[0].mxu0 %v453
    %v530 = vpop.f32.mrb[0].mxu0
    %v531 = vadd.f32 %v449, %v530
    %v532 = vpop.f32.mrb[0].mxu0
    %533 = vmatprep.mubr.f32.mxu0 0.0
    %534 = vmatmul.mubr.f32.gmra.mrb[0].mxu0 %v456
    %v535 = vpop.f32.mrb[0].mxu0
    %v536 = vadd.f32 %v449, %v535
    %v537 = vpop.f32.mrb[0].mxu0
    %538 = vmatprep.mubr.f32.mxu0 0.0
    %539 = vmatmul.mubr.f32.gmra.mrb[0].mxu0 %v459
    %v540 = vpop.f32.mrb[0].mxu0
    %v541 = vadd.f32 %v449, %v540
    %v542 = vpop.f32.mrb[0].mxu0
    %543 = vmatprep.mubr.f32.mxu0 0.0
    %544 = vmatmul.mubr.f32.gmra.mrb[0].mxu0 %v462
    %v545 = vpop.f32.mrb[0].mxu0
    %v546 = vadd.f32 %v449, %v545
    %v547 = vpop.f32.mrb[0].mxu0
    %548 = vdwg.mxu0
    %v549 = vld [vmem:[%s11] sm:$0xff]
    %v550 = vld [vmem:[%s11 + $0x8] sm:$0xff]
    %v551 = vld [vmem:[#allocation13] sm:$0x1]
    %v553 = vlaneseq
    %v554 = vshrl.u32 %v553, 7
    %v555 = vsub.s32 0, %v554
    %v556 = vrot.slane %v551, %v555
    %558 = vmatprep.subr.mxu0 0.0
    %559 = vmatpush1.msra.mxu0 %v549
    %560 = vmatprep.subr.mxu0 0.0
    %561 = vmatpush1.msra.mxu0 %v550
    %562 = vmatprep.subr.mxu0 0.0
    %563 = vmatpush1.msra.mxu0 0.0
    %564 = vmatprep.subr.mxu0 0.0
    %565 = vmatpush1.msra.mxu0 0.0
    %566 = vmatprep.subr.mxu0 0.0
    %567 = vmatpush1.msra.mxu0 0.0
    %568 = vmatprep.subr.mxu0 0.0
    %569 = vmatpush1.msra.mxu0 0.0
    %570 = vmatprep.subr.mxu0 0.0
    %571 = vmatpush1.msra.mxu0 0.0
    %572 = vmatprep.subr.mxu0 0.0
    %573 = vmatpush1.msra.mxu0 0.0
    %574 = vmatprep.subr.mxu0 0.0
    %575 = vmatpush1.msra.mxu0 0.0
    %576 = vmatprep.subr.mxu0 0.0
    %577 = vmatpush1.msra.mxu0 0.0
    %578 = vmatprep.subr.mxu0 0.0
    %579 = vmatpush1.msra.mxu0 0.0
    %580 = vmatprep.subr.mxu0 0.0
    %581 = vmatpush1.msra.mxu0 0.0
    %582 = vmatprep.subr.mxu0 0.0
    %583 = vmatpush1.msra.mxu0 0.0
    %584 = vmatprep.subr.mxu0 0.0
    %585 = vmatpush1.msra.mxu0 0.0
    %586 = vmatprep.subr.mxu0 0.0
    %587 = vmatpush1.msra.mxu0 0.0
    %588 = vmatprep.subr.mxu0 0.0
    %589 = vmatpush1.msra.mxu0 0.0
    %590 = vmatprep.subr.mxu0 0.0
    %591 = vmatpush1.msra.mxu0 0.0
    %592 = vmatprep.subr.mxu0 0.0
    %593 = vmatpush1.msra.mxu0 0.0
    %594 = vmatprep.subr.mxu0 0.0
    %595 = vmatpush1.msra.mxu0 0.0
    %596 = vmatprep.subr.mxu0 0.0
    %597 = vmatpush1.msra.mxu0 0.0
    %598 = vmatprep.subr.mxu0 0.0
    %599 = vmatpush1.msra.mxu0 0.0
    %600 = vmatprep.subr.mxu0 0.0
    %601 = vmatpush1.msra.mxu0 0.0
    %602 = vmatprep.subr.mxu0 0.0
    %603 = vmatpush1.msra.mxu0 0.0
    %604 = vmatprep.subr.mxu0 0.0
    %605 = vmatpush1.msra.mxu0 0.0
    %606 = vmatprep.subr.mxu0 0.0
    %607 = vmatpush1.msra.mxu0 0.0
    %608 = vmatprep.subr.mxu0 0.0
    %609 = vmatpush1.msra.mxu0 0.0
    %610 = vmatprep.subr.mxu0 0.0
    %611 = vmatpush1.msra.mxu0 0.0
    %612 = vmatprep.subr.mxu0 0.0
    %613 = vmatpush1.msra.mxu0 0.0
    %614 = vmatprep.subr.mxu0 0.0
    %615 = vmatpush1.msra.mxu0 0.0
    %616 = vmatprep.subr.mxu0 0.0
    %617 = vmatpush1.msra.mxu0 0.0
    %618 = vmatprep.subr.mxu0 0.0
    %619 = vmatpush1.msra.mxu0 0.0
    %620 = vmatprep.subr.mxu0 0.0
    %621 = vmatpush1.msra.mxu0 0.0
    %622 = vmatprep.mubr.f32.mxu0 0.0
    %623 = vmatmul.mubr.f32.gmra.mrb[0].mxu0 %v453
    %v624 = vpop.f32.mrb[0].mxu0
    %v625 = vadd.f32 %v556, %v624
    %v626 = vpop.f32.mrb[0].mxu0
    %627 = vmatprep.mubr.f32.mxu0 0.0
    %628 = vmatmul.mubr.f32.gmra.mrb[0].mxu0 %v456
    %v629 = vpop.f32.mrb[0].mxu0
    %v630 = vadd.f32 %v556, %v629
    %v631 = vpop.f32.mrb[0].mxu0
    %632 = vmatprep.mubr.f32.mxu0 0.0
    %633 = vmatmul.mubr.f32.gmra.mrb[0].mxu0 %v459
    %v634 = vpop.f32.mrb[0].mxu0
    %v635 = vadd.f32 %v556, %v634
    %v636 = vpop.f32.mrb[0].mxu0
    %637 = vmatprep.mubr.f32.mxu0 0.0
    %638 = vmatmul.mubr.f32.gmra.mrb[0].mxu0 %v462
    %v639 = vpop.f32.mrb[0].mxu0
    %v640 = vadd.f32 %v556, %v639
    %v641 = vpop.f32.mrb[0].mxu0
    %642 = vdwg.mxu0
    %v643 = vld [vmem:[#allocation8] sm:$0xff]
    %v644 = vld [vmem:[#allocation8 + $0x8] sm:$0xff]
    %v645 = vld [vmem:[#allocation11] sm:$0xff]
    %v646 = vld [vmem:[#allocation11 + $0x8] sm:$0xff]
    %v647 = vmax.f32 %v531, 0.0
    %v648 = vmax.f32 %v640, 0.0
    %v650 = vsel %vm451, %v647, 0
    %652 = vmatprep.subr.mxu0 0.0
    %653 = vmatpush1.msra.mxu0 %v643
    %654 = vmatprep.subr.mxu0 0.0
    %655 = vmatpush1.msra.mxu0 %v644
    %656 = vmatprep.subr.mxu0 0.0
    %657 = vmatpush1.msra.mxu0 0.0
    %658 = vmatprep.subr.mxu0 0.0
    %659 = vmatpush1.msra.mxu0 0.0
    %660 = vmatprep.subr.mxu0 0.0
    %661 = vmatpush1.msra.mxu0 0.0
    %662 = vmatprep.subr.mxu0 0.0
    %663 = vmatpush1.msra.mxu0 0.0
    %664 = vmatprep.subr.mxu0 0.0
    %665 = vmatpush1.msra.mxu0 0.0
    %666 = vmatprep.subr.mxu0 0.0
    %667 = vmatpush1.msra.mxu0 0.0
    %668 = vmatprep.subr.mxu0 0.0
    %669 = vmatpush1.msra.mxu0 0.0
    %670 = vmatprep.subr.mxu0 0.0
    %671 = vmatpush1.msra.mxu0 0.0
    %672 = vmatprep.subr.mxu0 0.0
    %673 = vmatpush1.msra.mxu0 0.0
    %674 = vmatprep.subr.mxu0 0.0
    %675 = vmatpush1.msra.mxu0 0.0
    %676 = vmatprep.subr.mxu0 0.0
    %677 = vmatpush1.msra.mxu0 0.0
    %678 = vmatprep.subr.mxu0 0.0
    %679 = vmatpush1.msra.mxu0 0.0
    %680 = vmatprep.subr.mxu0 0.0
    %681 = vmatpush1.msra.mxu0 0.0
    %682 = vmatprep.subr.mxu0 0.0
    %683 = vmatpush1.msra.mxu0 0.0
    %684 = vmatprep.subr.mxu0 0.0
    %685 = vmatpush1.msra.mxu0 0.0
    %686 = vmatprep.subr.mxu0 0.0
    %687 = vmatpush1.msra.mxu0 0.0
    %688 = vmatprep.subr.mxu0 0.0
    %689 = vmatpush1.msra.mxu0 0.0
    %690 = vmatprep.subr.mxu0 0.0
    %691 = vmatpush1.msra.mxu0 0.0
    %692 = vmatprep.subr.mxu0 0.0
    %693 = vmatpush1.msra.mxu0 0.0
    %694 = vmatprep.subr.mxu0 0.0
    %695 = vmatpush1.msra.mxu0 0.0
    %696 = vmatprep.subr.mxu0 0.0
    %697 = vmatpush1.msra.mxu0 0.0
    %698 = vmatprep.subr.mxu0 0.0
    %699 = vmatpush1.msra.mxu0 0.0
    %700 = vmatprep.subr.mxu0 0.0
    %701 = vmatpush1.msra.mxu0 0.0
    %702 = vmatprep.subr.mxu0 0.0
    %703 = vmatpush1.msra.mxu0 0.0
    %704 = vmatprep.subr.mxu0 0.0
    %705 = vmatpush1.msra.mxu0 0.0
    %706 = vmatprep.subr.mxu0 0.0
    %707 = vmatpush1.msra.mxu0 0.0
    %708 = vmatprep.subr.mxu0 0.0
    %709 = vmatpush1.msra.mxu0 0.0
    %710 = vmatprep.subr.mxu0 0.0
    %711 = vmatpush1.msra.mxu0 0.0
    %712 = vmatprep.subr.mxu0 0.0
    %713 = vmatpush1.msra.mxu0 0.0
    %714 = vmatprep.subr.mxu0 0.0
    %715 = vmatpush1.msra.mxu0 0.0
    %716 = vmatprep.mubr.f32.mxu0 0.0
    %717 = vmatmul.mubr.f32.gmra.mrb[0].mxu0 %v650
    %v718 = vpop.f32.mrb[0].mxu0
    %v719 = vadd.f32 0.0, %v718
    %v720 = vpop.f32.mrb[0].mxu0
    %721 = vdwg.mxu0
    %v723 = vrot.slane %v719, 4
    %v725 = vadd.f32 %v531, %v723
    %v726 = vmax.f32 %v725, 0.0
    %v728 = vrot.slane %v648, 4
    %v729 = vsel %vm451, %v728, 0
    %731 = vmatprep.subr.mxu0 0.0
    %732 = vmatpush1.msra.mxu0 %v645
    %733 = vmatprep.subr.mxu0 0.0
    %734 = vmatpush1.msra.mxu0 %v646
    %735 = vmatprep.subr.mxu0 0.0
    %736 = vmatpush1.msra.mxu0 0.0
    %737 = vmatprep.subr.mxu0 0.0
    %738 = vmatpush1.msra.mxu0 0.0
    %739 = vmatprep.subr.mxu0 0.0
    %740 = vmatpush1.msra.mxu0 0.0
    %741 = vmatprep.subr.mxu0 0.0
    %742 = vmatpush1.msra.mxu0 0.0
    %743 = vmatprep.subr.mxu0 0.0
    %744 = vmatpush1.msra.mxu0 0.0
    %745 = vmatprep.subr.mxu0 0.0
    %746 = vmatpush1.msra.mxu0 0.0
    %747 = vmatprep.subr.mxu0 0.0
    %748 = vmatpush1.msra.mxu0 0.0
    %749 = vmatprep.subr.mxu0 0.0
    %750 = vmatpush1.msra.mxu0 0.0
    %751 = vmatprep.subr.mxu0 0.0
    %752 = vmatpush1.msra.mxu0 0.0
    %753 = vmatprep.subr.mxu0 0.0
    %754 = vmatpush1.msra.mxu0 0.0
    %755 = vmatprep.subr.mxu0 0.0
    %756 = vmatpush1.msra.mxu0 0.0
    %757 = vmatprep.subr.mxu0 0.0
    %758 = vmatpush1.msra.mxu0 0.0
    %759 = vmatprep.subr.mxu0 0.0
    %760 = vmatpush1.msra.mxu0 0.0
    %761 = vmatprep.subr.mxu0 0.0
    %762 = vmatpush1.msra.mxu0 0.0
    %763 = vmatprep.subr.mxu0 0.0
    %764 = vmatpush1.msra.mxu0 0.0
    %765 = vmatprep.subr.mxu0 0.0
    %766 = vmatpush1.msra.mxu0 0.0
    %767 = vmatprep.subr.mxu0 0.0
    %768 = vmatpush1.msra.mxu0 0.0
    %769 = vmatprep.subr.mxu0 0.0
    %770 = vmatpush1.msra.mxu0 0.0
    %771 = vmatprep.subr.mxu0 0.0
    %772 = vmatpush1.msra.mxu0 0.0
    %773 = vmatprep.subr.mxu0 0.0
    %774 = vmatpush1.msra.mxu0 0.0
    %775 = vmatprep.subr.mxu0 0.0
    %776 = vmatpush1.msra.mxu0 0.0
    %777 = vmatprep.subr.mxu0 0.0
    %778 = vmatpush1.msra.mxu0 0.0
    %779 = vmatprep.subr.mxu0 0.0
    %780 = vmatpush1.msra.mxu0 0.0
    %781 = vmatprep.subr.mxu0 0.0
    %782 = vmatpush1.msra.mxu0 0.0
    %783 = vmatprep.subr.mxu0 0.0
    %784 = vmatpush1.msra.mxu0 0.0
    %785 = vmatprep.subr.mxu0 0.0
    %786 = vmatpush1.msra.mxu0 0.0
    %787 = vmatprep.subr.mxu0 0.0
    %788 = vmatpush1.msra.mxu0 0.0
    %789 = vmatprep.subr.mxu0 0.0
    %790 = vmatpush1.msra.mxu0 0.0
    %791 = vmatprep.subr.mxu0 0.0
    %792 = vmatpush1.msra.mxu0 0.0
    %793 = vmatprep.subr.mxu0 0.0
    %794 = vmatpush1.msra.mxu0 0.0
    %795 = vmatprep.mubr.f32.mxu0 0.0
    %796 = vmatmul.mubr.f32.gmra.mrb[0].mxu0 %v729
    %v797 = vpop.f32.mrb[0].mxu0
    %v798 = vadd.f32 0.0, %v797
    %v799 = vpop.f32.mrb[0].mxu0
    %800 = vdwg.mxu0
    %v801 = vadd.f32 %v640, %v798
    %v802 = vmax.f32 %v801, 0.0
    %v804 = vrot.slane %v726, 4
    %v805 = vsel %vm451, %v804, 0
    %807 = vmatprep.subr.mxu0 0.0
    %808 = vmatpush1.msra.mxu0 %v643
    %809 = vmatprep.subr.mxu0 0.0
    %810 = vmatpush1.msra.mxu0 %v644
    %811 = vmatprep.subr.mxu0 0.0
    %812 = vmatpush1.msra.mxu0 0.0
    %813 = vmatprep.subr.mxu0 0.0
    %814 = vmatpush1.msra.mxu0 0.0
    %815 = vmatprep.subr.mxu0 0.0
    %816 = vmatpush1.msra.mxu0 0.0
    %817 = vmatprep.subr.mxu0 0.0
    %818 = vmatpush1.msra.mxu0 0.0
    %819 = vmatprep.subr.mxu0 0.0
    %820 = vmatpush1.msra.mxu0 0.0
    %821 = vmatprep.subr.mxu0 0.0
    %822 = vmatpush1.msra.mxu0 0.0
    %823 = vmatprep.subr.mxu0 0.0
    %824 = vmatpush1.msra.mxu0 0.0
    %825 = vmatprep.subr.mxu0 0.0
    %826 = vmatpush1.msra.mxu0 0.0
    %827 = vmatprep.subr.mxu0 0.0
    %828 = vmatpush1.msra.mxu0 0.0
    %829 = vmatprep.subr.mxu0 0.0
    %830 = vmatpush1.msra.mxu0 0.0
    %831 = vmatprep.subr.mxu0 0.0
    %832 = vmatpush1.msra.mxu0 0.0
    %833 = vmatprep.subr.mxu0 0.0
    %834 = vmatpush1.msra.mxu0 0.0
    %835 = vmatprep.subr.mxu0 0.0
    %836 = vmatpush1.msra.mxu0 0.0
    %837 = vmatprep.subr.mxu0 0.0
    %838 = vmatpush1.msra.mxu0 0.0
    %839 = vmatprep.subr.mxu0 0.0
    %840 = vmatpush1.msra.mxu0 0.0
    %841 = vmatprep.subr.mxu0 0.0
    %842 = vmatpush1.msra.mxu0 0.0
    %843 = vmatprep.subr.mxu0 0.0
    %844 = vmatpush1.msra.mxu0 0.0
    %845 = vmatprep.subr.mxu0 0.0
    %846 = vmatpush1.msra.mxu0 0.0
    %847 = vmatprep.subr.mxu0 0.0
    %848 = vmatpush1.msra.mxu0 0.0
    %849 = vmatprep.subr.mxu0 0.0
    %850 = vmatpush1.msra.mxu0 0.0
    %851 = vmatprep.subr.mxu0 0.0
    %852 = vmatpush1.msra.mxu0 0.0
    %853 = vmatprep.subr.mxu0 0.0
    %854 = vmatpush1.msra.mxu0 0.0
    %855 = vmatprep.subr.mxu0 0.0
    %856 = vmatpush1.msra.mxu0 0.0
    %857 = vmatprep.subr.mxu0 0.0
    %858 = vmatpush1.msra.mxu0 0.0
    %859 = vmatprep.subr.mxu0 0.0
    %860 = vmatpush1.msra.mxu0 0.0
    %861 = vmatprep.subr.mxu0 0.0
    %862 = vmatpush1.msra.mxu0 0.0
    %863 = vmatprep.subr.mxu0 0.0
    %864 = vmatpush1.msra.mxu0 0.0
    %865 = vmatprep.subr.mxu0 0.0
    %866 = vmatpush1.msra.mxu0 0.0
    %867 = vmatprep.subr.mxu0 0.0
    %868 = vmatpush1.msra.mxu0 0.0
    %869 = vmatprep.subr.mxu0 0.0
    %870 = vmatpush1.msra.mxu0 0.0
    %871 = vmatprep.mubr.f32.mxu0 0.0
    %872 = vmatmul.mubr.f32.gmra.mrb[0].mxu0 %v805
    %v873 = vpop.f32.mrb[0].mxu0
    %v874 = vadd.f32 0.0, %v873
    %v875 = vpop.f32.mrb[0].mxu0
    %876 = vdwg.mxu0
    %v877 = vadd.f32 %v536, %v874
    %v878 = vmax.f32 %v877, 0.0
    %v880 = vsel %vm451, %v802, 0
    %882 = vmatprep.subr.mxu0 0.0
    %883 = vmatpush1.msra.mxu0 %v645
    %884 = vmatprep.subr.mxu0 0.0
    %885 = vmatpush1.msra.mxu0 %v646
    %886 = vmatprep.subr.mxu0 0.0
    %887 = vmatpush1.msra.mxu0 0.0
    %888 = vmatprep.subr.mxu0 0.0
    %889 = vmatpush1.msra.mxu0 0.0
    %890 = vmatprep.subr.mxu0 0.0
    %891 = vmatpush1.msra.mxu0 0.0
    %892 = vmatprep.subr.mxu0 0.0
    %893 = vmatpush1.msra.mxu0 0.0
    %894 = vmatprep.subr.mxu0 0.0
    %895 = vmatpush1.msra.mxu0 0.0
    %896 = vmatprep.subr.mxu0 0.0
    %897 = vmatpush1.msra.mxu0 0.0
    %898 = vmatprep.subr.mxu0 0.0
    %899 = vmatpush1.msra.mxu0 0.0
    %900 = vmatprep.subr.mxu0 0.0
    %901 = vmatpush1.msra.mxu0 0.0
    %902 = vmatprep.subr.mxu0 0.0
    %903 = vmatpush1.msra.mxu0 0.0
    %904 = vmatprep.subr.mxu0 0.0
    %905 = vmatpush1.msra.mxu0 0.0
    %906 = vmatprep.subr.mxu0 0.0
    %907 = vmatpush1.msra.mxu0 0.0
    %908 = vmatprep.subr.mxu0 0.0
    %909 = vmatpush1.msra.mxu0 0.0
    %910 = vmatprep.subr.mxu0 0.0
    %911 = vmatpush1.msra.mxu0 0.0
    %912 = vmatprep.subr.mxu0 0.0
    %913 = vmatpush1.msra.mxu0 0.0
    %914 = vmatprep.subr.mxu0 0.0
    %915 = vmatpush1.msra.mxu0 0.0
    %916 = vmatprep.subr.mxu0 0.0
    %917 = vmatpush1.msra.mxu0 0.0
    %918 = vmatprep.subr.mxu0 0.0
    %919 = vmatpush1.msra.mxu0 0.0
    %920 = vmatprep.subr.mxu0 0.0
    %921 = vmatpush1.msra.mxu0 0.0
    %922 = vmatprep.subr.mxu0 0.0
    %923 = vmatpush1.msra.mxu0 0.0
    %924 = vmatprep.subr.mxu0 0.0
    %925 = vmatpush1.msra.mxu0 0.0
    %926 = vmatprep.subr.mxu0 0.0
    %927 = vmatpush1.msra.mxu0 0.0
    %928 = vmatprep.subr.mxu0 0.0
    %929 = vmatpush1.msra.mxu0 0.0
    %930 = vmatprep.subr.mxu0 0.0
    %931 = vmatpush1.msra.mxu0 0.0
    %932 = vmatprep.subr.mxu0 0.0
    %933 = vmatpush1.msra.mxu0 0.0
    %934 = vmatprep.subr.mxu0 0.0
    %935 = vmatpush1.msra.mxu0 0.0
    %936 = vmatprep.subr.mxu0 0.0
    %937 = vmatpush1.msra.mxu0 0.0
    %938 = vmatprep.subr.mxu0 0.0
    %939 = vmatpush1.msra.mxu0 0.0
    %940 = vmatprep.subr.mxu0 0.0
    %941 = vmatpush1.msra.mxu0 0.0
    %942 = vmatprep.subr.mxu0 0.0
    %943 = vmatpush1.msra.mxu0 0.0
    %944 = vmatprep.subr.mxu0 0.0
    %945 = vmatpush1.msra.mxu0 0.0
    %946 = vmatprep.mubr.f32.mxu0 0.0
    %947 = vmatmul.mubr.f32.gmra.mrb[0].mxu0 %v880
    %v948 = vpop.f32.mrb[0].mxu0
    %v949 = vadd.f32 0.0, %v948
    %v950 = vpop.f32.mrb[0].mxu0
    %951 = vdwg.mxu0
    %v953 = vrot.slane %v949, 4
    %v955 = vadd.f32 %v635, %v953
    %v956 = vmax.f32 %v955, 0.0
    %v958 = vsel %vm451, %v878, 0
    %960 = vmatprep.subr.mxu0 0.0
    %961 = vmatpush1.msra.mxu0 %v643
    %962 = vmatprep.subr.mxu0 0.0
    %963 = vmatpush1.msra.mxu0 %v644
    %964 = vmatprep.subr.mxu0 0.0
    %965 = vmatpush1.msra.mxu0 0.0
    %966 = vmatprep.subr.mxu0 0.0
    %967 = vmatpush1.msra.mxu0 0.0
    %968 = vmatprep.subr.mxu0 0.0
    %969 = vmatpush1.msra.mxu0 0.0
    %970 = vmatprep.subr.mxu0 0.0
    %971 = vmatpush1.msra.mxu0 0.0
    %972 = vmatprep.subr.mxu0 0.0
    %973 = vmatpush1.msra.mxu0 0.0
    %974 = vmatprep.subr.mxu0 0.0
    %975 = vmatpush1.msra.mxu0 0.0
    %976 = vmatprep.subr.mxu0 0.0
    %977 = vmatpush1.msra.mxu0 0.0
    %978 = vmatprep.subr.mxu0 0.0
    %979 = vmatpush1.msra.mxu0 0.0
    %980 = vmatprep.subr.mxu0 0.0
    %981 = vmatpush1.msra.mxu0 0.0
    %982 = vmatprep.subr.mxu0 0.0
    %983 = vmatpush1.msra.mxu0 0.0
    %984 = vmatprep.subr.mxu0 0.0
    %985 = vmatpush1.msra.mxu0 0.0
    %986 = vmatprep.subr.mxu0 0.0
    %987 = vmatpush1.msra.mxu0 0.0
    %988 = vmatprep.subr.mxu0 0.0
    %989 = vmatpush1.msra.mxu0 0.0
    %990 = vmatprep.subr.mxu0 0.0
    %991 = vmatpush1.msra.mxu0 0.0
    %992 = vmatprep.subr.mxu0 0.0
    %993 = vmatpush1.msra.mxu0 0.0
    %994 = vmatprep.subr.mxu0 0.0
    %995 = vmatpush1.msra.mxu0 0.0
    %996 = vmatprep.subr.mxu0 0.0
    %997 = vmatpush1.msra.mxu0 0.0
    %998 = vmatprep.subr.mxu0 0.0
    %999 = vmatpush1.msra.mxu0 0.0
    %1000 = vmatprep.subr.mxu0 0.0
    %1001 = vmatpush1.msra.mxu0 0.0
    %1002 = vmatprep.subr.mxu0 0.0
    %1003 = vmatpush1.msra.mxu0 0.0
    %1004 = vmatprep.subr.mxu0 0.0
    %1005 = vmatpush1.msra.mxu0 0.0
    %1006 = vmatprep.subr.mxu0 0.0
    %1007 = vmatpush1.msra.mxu0 0.0
    %1008 = vmatprep.subr.mxu0 0.0
    %1009 = vmatpush1.msra.mxu0 0.0
    %1010 = vmatprep.subr.mxu0 0.0
    %1011 = vmatpush1.msra.mxu0 0.0
    %1012 = vmatprep.subr.mxu0 0.0
    %1013 = vmatpush1.msra.mxu0 0.0
    %1014 = vmatprep.subr.mxu0 0.0
    %1015 = vmatpush1.msra.mxu0 0.0
    %1016 = vmatprep.subr.mxu0 0.0
    %1017 = vmatpush1.msra.mxu0 0.0
    %1018 = vmatprep.subr.mxu0 0.0
    %1019 = vmatpush1.msra.mxu0 0.0
    %1020 = vmatprep.subr.mxu0 0.0
    %1021 = vmatpush1.msra.mxu0 0.0
    %1022 = vmatprep.subr.mxu0 0.0
    %1023 = vmatpush1.msra.mxu0 0.0
    %1024 = vmatprep.mubr.f32.mxu0 0.0
    %1025 = vmatmul.mubr.f32.gmra.mrb[0].mxu0 %v958
    %v1026 = vpop.f32.mrb[0].mxu0
    %v1027 = vadd.f32 0.0, %v1026
    %v1028 = vpop.f32.mrb[0].mxu0
    %1029 = vdwg.mxu0
    %v1031 = vrot.slane %v1027, 4
    %v1033 = vadd.f32 %v536, %v1031
    %v1034 = vmax.f32 %v1033, 0.0
    %v1036 = vrot.slane %v956, 4
    %v1037 = vsel %vm451, %v1036, 0
    %1039 = vmatprep.subr.mxu0 0.0
    %1040 = vmatpush1.msra.mxu0 %v645
    %1041 = vmatprep.subr.mxu0 0.0
    %1042 = vmatpush1.msra.mxu0 %v646
    %1043 = vmatprep.subr.mxu0 0.0
    %1044 = vmatpush1.msra.mxu0 0.0
    %1045 = vmatprep.subr.mxu0 0.0
    %1046 = vmatpush1.msra.mxu0 0.0
    %1047 = vmatprep.subr.mxu0 0.0
    %1048 = vmatpush1.msra.mxu0 0.0
    %1049 = vmatprep.subr.mxu0 0.0
    %1050 = vmatpush1.msra.mxu0 0.0
    %1051 = vmatprep.subr.mxu0 0.0
    %1052 = vmatpush1.msra.mxu0 0.0
    %1053 = vmatprep.subr.mxu0 0.0
    %1054 = vmatpush1.msra.mxu0 0.0
    %1055 = vmatprep.subr.mxu0 0.0
    %1056 = vmatpush1.msra.mxu0 0.0
    %1057 = vmatprep.subr.mxu0 0.0
    %1058 = vmatpush1.msra.mxu0 0.0
    %1059 = vmatprep.subr.mxu0 0.0
    %1060 = vmatpush1.msra.mxu0 0.0
    %1061 = vmatprep.subr.mxu0 0.0
    %1062 = vmatpush1.msra.mxu0 0.0
    %1063 = vmatprep.subr.mxu0 0.0
    %1064 = vmatpush1.msra.mxu0 0.0
    %1065 = vmatprep.subr.mxu0 0.0
    %1066 = vmatpush1.msra.mxu0 0.0
    %1067 = vmatprep.subr.mxu0 0.0
    %1068 = vmatpush1.msra.mxu0 0.0
    %1069 = vmatprep.subr.mxu0 0.0
    %1070 = vmatpush1.msra.mxu0 0.0
    %1071 = vmatprep.subr.mxu0 0.0
    %1072 = vmatpush1.msra.mxu0 0.0
    %1073 = vmatprep.subr.mxu0 0.0
    %1074 = vmatpush1.msra.mxu0 0.0
    %1075 = vmatprep.subr.mxu0 0.0
    %1076 = vmatpush1.msra.mxu0 0.0
    %1077 = vmatprep.subr.mxu0 0.0
    %1078 = vmatpush1.msra.mxu0 0.0
    %1079 = vmatprep.subr.mxu0 0.0
    %1080 = vmatpush1.msra.mxu0 0.0
    %1081 = vmatprep.subr.mxu0 0.0
    %1082 = vmatpush1.msra.mxu0 0.0
    %1083 = vmatprep.subr.mxu0 0.0
    %1084 = vmatpush1.msra.mxu0 0.0
    %1085 = vmatprep.subr.mxu0 0.0
    %1086 = vmatpush1.msra.mxu0 0.0
    %1087 = vmatprep.subr.mxu0 0.0
    %1088 = vmatpush1.msra.mxu0 0.0
    %1089 = vmatprep.subr.mxu0 0.0
    %1090 = vmatpush1.msra.mxu0 0.0
    %1091 = vmatprep.subr.mxu0 0.0
    %1092 = vmatpush1.msra.mxu0 0.0
    %1093 = vmatprep.subr.mxu0 0.0
    %1094 = vmatpush1.msra.mxu0 0.0
    %1095 = vmatprep.subr.mxu0 0.0
    %1096 = vmatpush1.msra.mxu0 0.0
    %1097 = vmatprep.subr.mxu0 0.0
    %1098 = vmatpush1.msra.mxu0 0.0
    %1099 = vmatprep.subr.mxu0 0.0
    %1100 = vmatpush1.msra.mxu0 0.0
    %1101 = vmatprep.subr.mxu0 0.0
    %1102 = vmatpush1.msra.mxu0 0.0
    %1103 = vmatprep.mubr.f32.mxu0 0.0
    %1104 = vmatmul.mubr.f32.gmra.mrb[0].mxu0 %v1037
    %v1105 = vpop.f32.mrb[0].mxu0
    %v1106 = vadd.f32 0.0, %v1105
    %v1107 = vpop.f32.mrb[0].mxu0
    %1108 = vdwg.mxu0
    %v1109 = vadd.f32 %v635, %v1106
    %v1110 = vmax.f32 %v1109, 0.0
    %v1112 = vrot.slane %v1034, 4
    %v1113 = vsel %vm451, %v1112, 0
    %1115 = vmatprep.subr.mxu0 0.0
    %1116 = vmatpush1.msra.mxu0 %v643
    %1117 = vmatprep.subr.mxu0 0.0
    %1118 = vmatpush1.msra.mxu0 %v644
    %1119 = vmatprep.subr.mxu0 0.0
    %1120 = vmatpush1.msra.mxu0 0.0
    %1121 = vmatprep.subr.mxu0 0.0
    %1122 = vmatpush1.msra.mxu0 0.0
    %1123 = vmatprep.subr.mxu0 0.0
    %1124 = vmatpush1.msra.mxu0 0.0
    %1125 = vmatprep.subr.mxu0 0.0
    %1126 = vmatpush1.msra.mxu0 0.0
    %1127 = vmatprep.subr.mxu0 0.0
    %1128 = vmatpush1.msra.mxu0 0.0
    %1129 = vmatprep.subr.mxu0 0.0
    %1130 = vmatpush1.msra.mxu0 0.0
    %1131 = vmatprep.subr.mxu0 0.0
    %1132 = vmatpush1.msra.mxu0 0.0
    %1133 = vmatprep.subr.mxu0 0.0
    %1134 = vmatpush1.msra.mxu0 0.0
    %1135 = vmatprep.subr.mxu0 0.0
    %1136 = vmatpush1.msra.mxu0 0.0
    %1137 = vmatprep.subr.mxu0 0.0
    %1138 = vmatpush1.msra.mxu0 0.0
    %1139 = vmatprep.subr.mxu0 0.0
    %1140 = vmatpush1.msra.mxu0 0.0
    %1141 = vmatprep.subr.mxu0 0.0
    %1142 = vmatpush1.msra.mxu0 0.0
    %1143 = vmatprep.subr.mxu0 0.0
    %1144 = vmatpush1.msra.mxu0 0.0
    %1145 = vmatprep.subr.mxu0 0.0
    %1146 = vmatpush1.msra.mxu0 0.0
    %1147 = vmatprep.subr.mxu0 0.0
    %1148 = vmatpush1.msra.mxu0 0.0
    %1149 = vmatprep.subr.mxu0 0.0
    %1150 = vmatpush1.msra.mxu0 0.0
    %1151 = vmatprep.subr.mxu0 0.0
    %1152 = vmatpush1.msra.mxu0 0.0
    %1153 = vmatprep.subr.mxu0 0.0
    %1154 = vmatpush1.msra.mxu0 0.0
    %1155 = vmatprep.subr.mxu0 0.0
    %1156 = vmatpush1.msra.mxu0 0.0
    %1157 = vmatprep.subr.mxu0 0.0
    %1158 = vmatpush1.msra.mxu0 0.0
    %1159 = vmatprep.subr.mxu0 0.0
    %1160 = vmatpush1.msra.mxu0 0.0
    %1161 = vmatprep.subr.mxu0 0.0
    %1162 = vmatpush1.msra.mxu0 0.0
    %1163 = vmatprep.subr.mxu0 0.0
    %1164 = vmatpush1.msra.mxu0 0.0
    %1165 = vmatprep.subr.mxu0 0.0
    %1166 = vmatpush1.msra.mxu0 0.0
    %1167 = vmatprep.subr.mxu0 0.0
    %1168 = vmatpush1.msra.mxu0 0.0
    %1169 = vmatprep.subr.mxu0 0.0
    %1170 = vmatpush1.msra.mxu0 0.0
    %1171 = vmatprep.subr.mxu0 0.0
    %1172 = vmatpush1.msra.mxu0 0.0
    %1173 = vmatprep.subr.mxu0 0.0
    %1174 = vmatpush1.msra.mxu0 0.0
    %1175 = vmatprep.subr.mxu0 0.0
    %1176 = vmatpush1.msra.mxu0 0.0
    %1177 = vmatprep.subr.mxu0 0.0
    %1178 = vmatpush1.msra.mxu0 0.0
    %1179 = vmatprep.mubr.f32.mxu0 0.0
    %1180 = vmatmul.mubr.f32.gmra.mrb[0].mxu0 %v1113
    %v1181 = vpop.f32.mrb[0].mxu0
    %v1182 = vadd.f32 0.0, %v1181
    %v1183 = vpop.f32.mrb[0].mxu0
    %1184 = vdwg.mxu0
    %v1185 = vadd.f32 %v541, %v1182
    %v1186 = vmax.f32 %v1185, 0.0
    %v1188 = vsel %vm451, %v1110, 0
    %1190 = vmatprep.subr.mxu0 0.0
    %1191 = vmatpush1.msra.mxu0 %v645
    %1192 = vmatprep.subr.mxu0 0.0
    %1193 = vmatpush1.msra.mxu0 %v646
    %1194 = vmatprep.subr.mxu0 0.0
    %1195 = vmatpush1.msra.mxu0 0.0
    %1196 = vmatprep.subr.mxu0 0.0
    %1197 = vmatpush1.msra.mxu0 0.0
    %1198 = vmatprep.subr.mxu0 0.0
    %1199 = vmatpush1.msra.mxu0 0.0
    %1200 = vmatprep.subr.mxu0 0.0
    %1201 = vmatpush1.msra.mxu0 0.0
    %1202 = vmatprep.subr.mxu0 0.0
    %1203 = vmatpush1.msra.mxu0 0.0
    %1204 = vmatprep.subr.mxu0 0.0
    %1205 = vmatpush1.msra.mxu0 0.0
    %1206 = vmatprep.subr.mxu0 0.0
    %1207 = vmatpush1.msra.mxu0 0.0
    %1208 = vmatprep.subr.mxu0 0.0
    %1209 = vmatpush1.msra.mxu0 0.0
    %1210 = vmatprep.subr.mxu0 0.0
    %1211 = vmatpush1.msra.mxu0 0.0
    %1212 = vmatprep.subr.mxu0 0.0
    %1213 = vmatpush1.msra.mxu0 0.0
    %1214 = vmatprep.subr.mxu0 0.0
    %1215 = vmatpush1.msra.mxu0 0.0
    %1216 = vmatprep.subr.mxu0 0.0
    %1217 = vmatpush1.msra.mxu0 0.0
    %1218 = vmatprep.subr.mxu0 0.0
    %1219 = vmatpush1.msra.mxu0 0.0
    %1220 = vmatprep.subr.mxu0 0.0
    %1221 = vmatpush1.msra.mxu0 0.0
    %1222 = vmatprep.subr.mxu0 0.0
    %1223 = vmatpush1.msra.mxu0 0.0
    %1224 = vmatprep.subr.mxu0 0.0
    %1225 = vmatpush1.msra.mxu0 0.0
    %1226 = vmatprep.subr.mxu0 0.0
    %1227 = vmatpush1.msra.mxu0 0.0
    %1228 = vmatprep.subr.mxu0 0.0
    %1229 = vmatpush1.msra.mxu0 0.0
    %1230 = vmatprep.subr.mxu0 0.0
    %1231 = vmatpush1.msra.mxu0 0.0
    %1232 = vmatprep.subr.mxu0 0.0
    %1233 = vmatpush1.msra.mxu0 0.0
    %1234 = vmatprep.subr.mxu0 0.0
    %1235 = vmatpush1.msra.mxu0 0.0
    %1236 = vmatprep.subr.mxu0 0.0
    %1237 = vmatpush1.msra.mxu0 0.0
    %1238 = vmatprep.subr.mxu0 0.0
    %1239 = vmatpush1.msra.mxu0 0.0
    %1240 = vmatprep.subr.mxu0 0.0
    %1241 = vmatpush1.msra.mxu0 0.0
    %1242 = vmatprep.subr.mxu0 0.0
    %1243 = vmatpush1.msra.mxu0 0.0
    %1244 = vmatprep.subr.mxu0 0.0
    %1245 = vmatpush1.msra.mxu0 0.0
    %1246 = vmatprep.subr.mxu0 0.0
    %1247 = vmatpush1.msra.mxu0 0.0
    %1248 = vmatprep.subr.mxu0 0.0
    %1249 = vmatpush1.msra.mxu0 0.0
    %1250 = vmatprep.subr.mxu0 0.0
    %1251 = vmatpush1.msra.mxu0 0.0
    %1252 = vmatprep.subr.mxu0 0.0
    %1253 = vmatpush1.msra.mxu0 0.0
    %1254 = vmatprep.mubr.f32.mxu0 0.0
    %1255 = vmatmul.mubr.f32.gmra.mrb[0].mxu0 %v1188
    %v1256 = vpop.f32.mrb[0].mxu0
    %v1257 = vadd.f32 0.0, %v1256
    %v1258 = vpop.f32.mrb[0].mxu0
    %1259 = vdwg.mxu0
    %v1261 = vrot.slane %v1257, 4
    %v1263 = vadd.f32 %v630, %v1261
    %v1264 = vmax.f32 %v1263, 0.0
    %v1266 = vsel %vm451, %v1186, 0
    %1268 = vmatprep.subr.mxu0 0.0
    %1269 = vmatpush1.msra.mxu0 %v643
    %1270 = vmatprep.subr.mxu0 0.0
    %1271 = vmatpush1.msra.mxu0 %v644
    %1272 = vmatprep.subr.mxu0 0.0
    %1273 = vmatpush1.msra.mxu0 0.0
    %1274 = vmatprep.subr.mxu0 0.0
    %1275 = vmatpush1.msra.mxu0 0.0
    %1276 = vmatprep.subr.mxu0 0.0
    %1277 = vmatpush1.msra.mxu0 0.0
    %1278 = vmatprep.subr.mxu0 0.0
    %1279 = vmatpush1.msra.mxu0 0.0
    %1280 = vmatprep.subr.mxu0 0.0
    %1281 = vmatpush1.msra.mxu0 0.0
    %1282 = vmatprep.subr.mxu0 0.0
    %1283 = vmatpush1.msra.mxu0 0.0
    %1284 = vmatprep.subr.mxu0 0.0
    %1285 = vmatpush1.msra.mxu0 0.0
    %1286 = vmatprep.subr.mxu0 0.0
    %1287 = vmatpush1.msra.mxu0 0.0
    %1288 = vmatprep.subr.mxu0 0.0
    %1289 = vmatpush1.msra.mxu0 0.0
    %1290 = vmatprep.subr.mxu0 0.0
    %1291 = vmatpush1.msra.mxu0 0.0
    %1292 = vmatprep.subr.mxu0 0.0
    %1293 = vmatpush1.msra.mxu0 0.0
    %1294 = vmatprep.subr.mxu0 0.0
    %1295 = vmatpush1.msra.mxu0 0.0
    %1296 = vmatprep.subr.mxu0 0.0
    %1297 = vmatpush1.msra.mxu0 0.0
    %1298 = vmatprep.subr.mxu0 0.0
    %1299 = vmatpush1.msra.mxu0 0.0
    %1300 = vmatprep.subr.mxu0 0.0
    %1301 = vmatpush1.msra.mxu0 0.0
    %1302 = vmatprep.subr.mxu0 0.0
    %1303 = vmatpush1.msra.mxu0 0.0
    %1304 = vmatprep.subr.mxu0 0.0
    %1305 = vmatpush1.msra.mxu0 0.0
    %1306 = vmatprep.subr.mxu0 0.0
    %1307 = vmatpush1.msra.mxu0 0.0
    %1308 = vmatprep.subr.mxu0 0.0
    %1309 = vmatpush1.msra.mxu0 0.0
    %1310 = vmatprep.subr.mxu0 0.0
    %1311 = vmatpush1.msra.mxu0 0.0
    %1312 = vmatprep.subr.mxu0 0.0
    %1313 = vmatpush1.msra.mxu0 0.0
    %1314 = vmatprep.subr.mxu0 0.0
    %1315 = vmatpush1.msra.mxu0 0.0
    %1316 = vmatprep.subr.mxu0 0.0
    %1317 = vmatpush1.msra.mxu0 0.0
    %1318 = vmatprep.subr.mxu0 0.0
    %1319 = vmatpush1.msra.mxu0 0.0
    %1320 = vmatprep.subr.mxu0 0.0
    %1321 = vmatpush1.msra.mxu0 0.0
    %1322 = vmatprep.subr.mxu0 0.0
    %1323 = vmatpush1.msra.mxu0 0.0
    %1324 = vmatprep.subr.mxu0 0.0
    %1325 = vmatpush1.msra.mxu0 0.0
    %1326 = vmatprep.subr.mxu0 0.0
    %1327 = vmatpush1.msra.mxu0 0.0
    %1328 = vmatprep.subr.mxu0 0.0
    %1329 = vmatpush1.msra.mxu0 0.0
    %1330 = vmatprep.subr.mxu0 0.0
    %1331 = vmatpush1.msra.mxu0 0.0
    %1332 = vmatprep.mubr.f32.mxu0 0.0
    %1333 = vmatmul.mubr.f32.gmra.mrb[0].mxu0 %v1266
    %v1334 = vpop.f32.mrb[0].mxu0
    %v1335 = vadd.f32 0.0, %v1334
    %v1336 = vpop.f32.mrb[0].mxu0
    %1337 = vdwg.mxu0
    %v1339 = vrot.slane %v1335, 4
    %v1341 = vadd.f32 %v541, %v1339
    %v1342 = vmax.f32 %v1341, 0.0
    %v1344 = vrot.slane %v1264, 4
    %v1345 = vsel %vm451, %v1344, 0
    %1347 = vmatprep.subr.mxu0 0.0
    %1348 = vmatpush1.msra.mxu0 %v645
    %1349 = vmatprep.subr.mxu0 0.0
    %1350 = vmatpush1.msra.mxu0 %v646
    %1351 = vmatprep.subr.mxu0 0.0
    %1352 = vmatpush1.msra.mxu0 0.0
    %1353 = vmatprep.subr.mxu0 0.0
    %1354 = vmatpush1.msra.mxu0 0.0
    %1355 = vmatprep.subr.mxu0 0.0
    %1356 = vmatpush1.msra.mxu0 0.0
    %1357 = vmatprep.subr.mxu0 0.0
    %1358 = vmatpush1.msra.mxu0 0.0
    %1359 = vmatprep.subr.mxu0 0.0
    %1360 = vmatpush1.msra.mxu0 0.0
    %1361 = vmatprep.subr.mxu0 0.0
    %1362 = vmatpush1.msra.mxu0 0.0
    %1363 = vmatprep.subr.mxu0 0.0
    %1364 = vmatpush1.msra.mxu0 0.0
    %1365 = vmatprep.subr.mxu0 0.0
    %1366 = vmatpush1.msra.mxu0 0.0
    %1367 = vmatprep.subr.mxu0 0.0
    %1368 = vmatpush1.msra.mxu0 0.0
    %1369 = vmatprep.subr.mxu0 0.0
    %1370 = vmatpush1.msra.mxu0 0.0
    %1371 = vmatprep.subr.mxu0 0.0
    %1372 = vmatpush1.msra.mxu0 0.0
    %1373 = vmatprep.subr.mxu0 0.0
    %1374 = vmatpush1.msra.mxu0 0.0
    %1375 = vmatprep.subr.mxu0 0.0
    %1376 = vmatpush1.msra.mxu0 0.0
    %1377 = vmatprep.subr.mxu0 0.0
    %1378 = vmatpush1.msra.mxu0 0.0
    %1379 = vmatprep.subr.mxu0 0.0
    %1380 = vmatpush1.msra.mxu0 0.0
    %1381 = vmatprep.subr.mxu0 0.0
    %1382 = vmatpush1.msra.mxu0 0.0
    %1383 = vmatprep.subr.mxu0 0.0
    %1384 = vmatpush1.msra.mxu0 0.0
    %1385 = vmatprep.subr.mxu0 0.0
    %1386 = vmatpush1.msra.mxu0 0.0
    %1387 = vmatprep.subr.mxu0 0.0
    %1388 = vmatpush1.msra.mxu0 0.0
    %1389 = vmatprep.subr.mxu0 0.0
    %1390 = vmatpush1.msra.mxu0 0.0
    %1391 = vmatprep.subr.mxu0 0.0
    %1392 = vmatpush1.msra.mxu0 0.0
    %1393 = vmatprep.subr.mxu0 0.0
    %1394 = vmatpush1.msra.mxu0 0.0
    %1395 = vmatprep.subr.mxu0 0.0
    %1396 = vmatpush1.msra.mxu0 0.0
    %1397 = vmatprep.subr.mxu0 0.0
    %1398 = vmatpush1.msra.mxu0 0.0
    %1399 = vmatprep.subr.mxu0 0.0
    %1400 = vmatpush1.msra.mxu0 0.0
    %1401 = vmatprep.subr.mxu0 0.0
    %1402 = vmatpush1.msra.mxu0 0.0
    %1403 = vmatprep.subr.mxu0 0.0
    %1404 = vmatpush1.msra.mxu0 0.0
    %1405 = vmatprep.subr.mxu0 0.0
    %1406 = vmatpush1.msra.mxu0 0.0
    %1407 = vmatprep.subr.mxu0 0.0
    %1408 = vmatpush1.msra.mxu0 0.0
    %1409 = vmatprep.subr.mxu0 0.0
    %1410 = vmatpush1.msra.mxu0 0.0
    %1411 = vmatprep.mubr.f32.mxu0 0.0
    %1412 = vmatmul.mubr.f32.gmra.mrb[0].mxu0 %v1345
    %v1413 = vpop.f32.mrb[0].mxu0
    %v1414 = vadd.f32 0.0, %v1413
    %v1415 = vpop.f32.mrb[0].mxu0
    %1416 = vdwg.mxu0
    %v1417 = vadd.f32 %v630, %v1414
    %v1418 = vmax.f32 %v1417, 0.0
    %v1420 = vrot.slane %v1342, 4
    %v1421 = vsel %vm451, %v1420, 0
    %1423 = vmatprep.subr.mxu0 0.0
    %1424 = vmatpush1.msra.mxu0 %v643
    %1425 = vmatprep.subr.mxu0 0.0
    %1426 = vmatpush1.msra.mxu0 %v644
    %1427 = vmatprep.subr.mxu0 0.0
    %1428 = vmatpush1.msra.mxu0 0.0
    %1429 = vmatprep.subr.mxu0 0.0
    %1430 = vmatpush1.msra.mxu0 0.0
    %1431 = vmatprep.subr.mxu0 0.0
    %1432 = vmatpush1.msra.mxu0 0.0
    %1433 = vmatprep.subr.mxu0 0.0
    %1434 = vmatpush1.msra.mxu0 0.0
    %1435 = vmatprep.subr.mxu0 0.0
    %1436 = vmatpush1.msra.mxu0 0.0
    %1437 = vmatprep.subr.mxu0 0.0
    %1438 = vmatpush1.msra.mxu0 0.0
    %1439 = vmatprep.subr.mxu0 0.0
    %1440 = vmatpush1.msra.mxu0 0.0
    %1441 = vmatprep.subr.mxu0 0.0
    %1442 = vmatpush1.msra.mxu0 0.0
    %1443 = vmatprep.subr.mxu0 0.0
    %1444 = vmatpush1.msra.mxu0 0.0
    %1445 = vmatprep.subr.mxu0 0.0
    %1446 = vmatpush1.msra.mxu0 0.0
    %1447 = vmatprep.subr.mxu0 0.0
    %1448 = vmatpush1.msra.mxu0 0.0
    %1449 = vmatprep.subr.mxu0 0.0
    %1450 = vmatpush1.msra.mxu0 0.0
    %1451 = vmatprep.subr.mxu0 0.0
    %1452 = vmatpush1.msra.mxu0 0.0
    %1453 = vmatprep.subr.mxu0 0.0
    %1454 = vmatpush1.msra.mxu0 0.0
    %1455 = vmatprep.subr.mxu0 0.0
    %1456 = vmatpush1.msra.mxu0 0.0
    %1457 = vmatprep.subr.mxu0 0.0
    %1458 = vmatpush1.msra.mxu0 0.0
    %1459 = vmatprep.subr.mxu0 0.0
    %1460 = vmatpush1.msra.mxu0 0.0
    %1461 = vmatprep.subr.mxu0 0.0
    %1462 = vmatpush1.msra.mxu0 0.0
    %1463 = vmatprep.subr.mxu0 0.0
    %1464 = vmatpush1.msra.mxu0 0.0
    %1465 = vmatprep.subr.mxu0 0.0
    %1466 = vmatpush1.msra.mxu0 0.0
    %1467 = vmatprep.subr.mxu0 0.0
    %1468 = vmatpush1.msra.mxu0 0.0
    %1469 = vmatprep.subr.mxu0 0.0
    %1470 = vmatpush1.msra.mxu0 0.0
    %1471 = vmatprep.subr.mxu0 0.0
    %1472 = vmatpush1.msra.mxu0 0.0
    %1473 = vmatprep.subr.mxu0 0.0
    %1474 = vmatpush1.msra.mxu0 0.0
    %1475 = vmatprep.subr.mxu0 0.0
    %1476 = vmatpush1.msra.mxu0 0.0
    %1477 = vmatprep.subr.mxu0 0.0
    %1478 = vmatpush1.msra.mxu0 0.0
    %1479 = vmatprep.subr.mxu0 0.0
    %1480 = vmatpush1.msra.mxu0 0.0
    %1481 = vmatprep.subr.mxu0 0.0
    %1482 = vmatpush1.msra.mxu0 0.0
    %1483 = vmatprep.subr.mxu0 0.0
    %1484 = vmatpush1.msra.mxu0 0.0
    %1485 = vmatprep.subr.mxu0 0.0
    %1486 = vmatpush1.msra.mxu0 0.0
    %1487 = vmatprep.mubr.f32.mxu0 0.0
    %1488 = vmatmul.mubr.f32.gmra.mrb[0].mxu0 %v1421
    %v1489 = vpop.f32.mrb[0].mxu0
    %v1490 = vadd.f32 0.0, %v1489
    %v1491 = vpop.f32.mrb[0].mxu0
    %1492 = vdwg.mxu0
    %v1493 = vadd.f32 %v546, %v1490
    %v1494 = vmax.f32 %v1493, 0.0
    %v1496 = vsel %vm451, %v1418, 0
    %1498 = vmatprep.subr.mxu0 0.0
    %1499 = vmatpush1.msra.mxu0 %v645
    %1500 = vmatprep.subr.mxu0 0.0
    %1501 = vmatpush1.msra.mxu0 %v646
    %1502 = vmatprep.subr.mxu0 0.0
    %1503 = vmatpush1.msra.mxu0 0.0
    %1504 = vmatprep.subr.mxu0 0.0
    %1505 = vmatpush1.msra.mxu0 0.0
    %1506 = vmatprep.subr.mxu0 0.0
    %1507 = vmatpush1.msra.mxu0 0.0
    %1508 = vmatprep.subr.mxu0 0.0
    %1509 = vmatpush1.msra.mxu0 0.0
    %1510 = vmatprep.subr.mxu0 0.0
    %1511 = vmatpush1.msra.mxu0 0.0
    %1512 = vmatprep.subr.mxu0 0.0
    %1513 = vmatpush1.msra.mxu0 0.0
    %1514 = vmatprep.subr.mxu0 0.0
    %1515 = vmatpush1.msra.mxu0 0.0
    %1516 = vmatprep.subr.mxu0 0.0
    %1517 = vmatpush1.msra.mxu0 0.0
    %1518 = vmatprep.subr.mxu0 0.0
    %1519 = vmatpush1.msra.mxu0 0.0
    %1520 = vmatprep.subr.mxu0 0.0
    %1521 = vmatpush1.msra.mxu0 0.0
    %1522 = vmatprep.subr.mxu0 0.0
    %1523 = vmatpush1.msra.mxu0 0.0
    %1524 = vmatprep.subr.mxu0 0.0
    %1525 = vmatpush1.msra.mxu0 0.0
    %1526 = vmatprep.subr.mxu0 0.0
    %1527 = vmatpush1.msra.mxu0 0.0
    %1528 = vmatprep.subr.mxu0 0.0
    %1529 = vmatpush1.msra.mxu0 0.0
    %1530 = vmatprep.subr.mxu0 0.0
    %1531 = vmatpush1.msra.mxu0 0.0
    %1532 = vmatprep.subr.mxu0 0.0
    %1533 = vmatpush1.msra.mxu0 0.0
    %1534 = vmatprep.subr.mxu0 0.0
    %1535 = vmatpush1.msra.mxu0 0.0
    %1536 = vmatprep.subr.mxu0 0.0
    %1537 = vmatpush1.msra.mxu0 0.0
    %1538 = vmatprep.subr.mxu0 0.0
    %1539 = vmatpush1.msra.mxu0 0.0
    %1540 = vmatprep.subr.mxu0 0.0
    %1541 = vmatpush1.msra.mxu0 0.0
    %1542 = vmatprep.subr.mxu0 0.0
    %1543 = vmatpush1.msra.mxu0 0.0
    %1544 = vmatprep.subr.mxu0 0.0
    %1545 = vmatpush1.msra.mxu0 0.0
    %1546 = vmatprep.subr.mxu0 0.0
    %1547 = vmatpush1.msra.mxu0 0.0
    %1548 = vmatprep.subr.mxu0 0.0
    %1549 = vmatpush1.msra.mxu0 0.0
    %1550 = vmatprep.subr.mxu0 0.0
    %1551 = vmatpush1.msra.mxu0 0.0
    %1552 = vmatprep.subr.mxu0 0.0
    %1553 = vmatpush1.msra.mxu0 0.0
    %1554 = vmatprep.subr.mxu0 0.0
    %1555 = vmatpush1.msra.mxu0 0.0
    %1556 = vmatprep.subr.mxu0 0.0
    %1557 = vmatpush1.msra.mxu0 0.0
    %1558 = vmatprep.subr.mxu0 0.0
    %1559 = vmatpush1.msra.mxu0 0.0
    %1560 = vmatprep.subr.mxu0 0.0
    %1561 = vmatpush1.msra.mxu0 0.0
    %1562 = vmatprep.mubr.f32.mxu0 0.0
    %1563 = vmatmul.mubr.f32.gmra.mrb[0].mxu0 %v1496
    %v1564 = vpop.f32.mrb[0].mxu0
    %v1565 = vadd.f32 0.0, %v1564
    %v1566 = vpop.f32.mrb[0].mxu0
    %1567 = vdwg.mxu0
    %v1569 = vrot.slane %v1565, 4
    %v1571 = vadd.f32 %v625, %v1569
    %v1572 = vmax.f32 %v1571, 0.0
    %v1574 = vsel %vm451, %v1494, 0
    %1576 = vmatprep.subr.mxu0 0.0
    %1577 = vmatpush1.msra.mxu0 %v643
    %1578 = vmatprep.subr.mxu0 0.0
    %1579 = vmatpush1.msra.mxu0 %v644
    %1580 = vmatprep.subr.mxu0 0.0
    %1581 = vmatpush1.msra.mxu0 0.0
    %1582 = vmatprep.subr.mxu0 0.0
    %1583 = vmatpush1.msra.mxu0 0.0
    %1584 = vmatprep.subr.mxu0 0.0
    %1585 = vmatpush1.msra.mxu0 0.0
    %1586 = vmatprep.subr.mxu0 0.0
    %1587 = vmatpush1.msra.mxu0 0.0
    %1588 = vmatprep.subr.mxu0 0.0
    %1589 = vmatpush1.msra.mxu0 0.0
    %1590 = vmatprep.subr.mxu0 0.0
    %1591 = vmatpush1.msra.mxu0 0.0
    %1592 = vmatprep.subr.mxu0 0.0
    %1593 = vmatpush1.msra.mxu0 0.0
    %1594 = vmatprep.subr.mxu0 0.0
    %1595 = vmatpush1.msra.mxu0 0.0
    %1596 = vmatprep.subr.mxu0 0.0
    %1597 = vmatpush1.msra.mxu0 0.0
    %1598 = vmatprep.subr.mxu0 0.0
    %1599 = vmatpush1.msra.mxu0 0.0
    %1600 = vmatprep.subr.mxu0 0.0
    %1601 = vmatpush1.msra.mxu0 0.0
    %1602 = vmatprep.subr.mxu0 0.0
    %1603 = vmatpush1.msra.mxu0 0.0
    %1604 = vmatprep.subr.mxu0 0.0
    %1605 = vmatpush1.msra.mxu0 0.0
    %1606 = vmatprep.subr.mxu0 0.0
    %1607 = vmatpush1.msra.mxu0 0.0
    %1608 = vmatprep.subr.mxu0 0.0
    %1609 = vmatpush1.msra.mxu0 0.0
    %1610 = vmatprep.subr.mxu0 0.0
    %1611 = vmatpush1.msra.mxu0 0.0
    %1612 = vmatprep.subr.mxu0 0.0
    %1613 = vmatpush1.msra.mxu0 0.0
    %1614 = vmatprep.subr.mxu0 0.0
    %1615 = vmatpush1.msra.mxu0 0.0
    %1616 = vmatprep.subr.mxu0 0.0
    %1617 = vmatpush1.msra.mxu0 0.0
    %1618 = vmatprep.subr.mxu0 0.0
    %1619 = vmatpush1.msra.mxu0 0.0
    %1620 = vmatprep.subr.mxu0 0.0
    %1621 = vmatpush1.msra.mxu0 0.0
    %1622 = vmatprep.subr.mxu0 0.0
    %1623 = vmatpush1.msra.mxu0 0.0
    %1624 = vmatprep.subr.mxu0 0.0
    %1625 = vmatpush1.msra.mxu0 0.0
    %1626 = vmatprep.subr.mxu0 0.0
    %1627 = vmatpush1.msra.mxu0 0.0
    %1628 = vmatprep.subr.mxu0 0.0
    %1629 = vmatpush1.msra.mxu0 0.0
    %1630 = vmatprep.subr.mxu0 0.0
    %1631 = vmatpush1.msra.mxu0 0.0
    %1632 = vmatprep.subr.mxu0 0.0
    %1633 = vmatpush1.msra.mxu0 0.0
    %1634 = vmatprep.subr.mxu0 0.0
    %1635 = vmatpush1.msra.mxu0 0.0
    %1636 = vmatprep.subr.mxu0 0.0
    %1637 = vmatpush1.msra.mxu0 0.0
    %1638 = vmatprep.subr.mxu0 0.0
    %1639 = vmatpush1.msra.mxu0 0.0
    %1640 = vmatprep.mubr.f32.mxu0 0.0
    %1641 = vmatmul.mubr.f32.gmra.mrb[0].mxu0 %v1574
    %v1642 = vpop.f32.mrb[0].mxu0
    %v1643 = vadd.f32 0.0, %v1642
    %v1644 = vpop.f32.mrb[0].mxu0
    %1645 = vdwg.mxu0
    %v1647 = vrot.slane %v1643, 4
    %v1649 = vadd.f32 %v546, %v1647
    %v1650 = vmax.f32 %v1649, 0.0
    %v1652 = vrot.slane %v1572, 4
    %v1653 = vsel %vm451, %v1652, 0
    %1655 = vmatprep.subr.mxu0 0.0
    %1656 = vmatpush1.msra.mxu0 %v645
    %1657 = vmatprep.subr.mxu0 0.0
    %1658 = vmatpush1.msra.mxu0 %v646
    %1659 = vmatprep.subr.mxu0 0.0
    %1660 = vmatpush1.msra.mxu0 0.0
    %1661 = vmatprep.subr.mxu0 0.0
    %1662 = vmatpush1.msra.mxu0 0.0
    %1663 = vmatprep.subr.mxu0 0.0
    %1664 = vmatpush1.msra.mxu0 0.0
    %1665 = vmatprep.subr.mxu0 0.0
    %1666 = vmatpush1.msra.mxu0 0.0
    %1667 = vmatprep.subr.mxu0 0.0
    %1668 = vmatpush1.msra.mxu0 0.0
    %1669 = vmatprep.subr.mxu0 0.0
    %1670 = vmatpush1.msra.mxu0 0.0
    %1671 = vmatprep.subr.mxu0 0.0
    %1672 = vmatpush1.msra.mxu0 0.0
    %1673 = vmatprep.subr.mxu0 0.0
    %1674 = vmatpush1.msra.mxu0 0.0
    %1675 = vmatprep.subr.mxu0 0.0
    %1676 = vmatpush1.msra.mxu0 0.0
    %1677 = vmatprep.subr.mxu0 0.0
    %1678 = vmatpush1.msra.mxu0 0.0
    %1679 = vmatprep.subr.mxu0 0.0
    %1680 = vmatpush1.msra.mxu0 0.0
    %1681 = vmatprep.subr.mxu0 0.0
    %1682 = vmatpush1.msra.mxu0 0.0
    %1683 = vmatprep.subr.mxu0 0.0
    %1684 = vmatpush1.msra.mxu0 0.0
    %1685 = vmatprep.subr.mxu0 0.0
    %1686 = vmatpush1.msra.mxu0 0.0
    %1687 = vmatprep.subr.mxu0 0.0
    %1688 = vmatpush1.msra.mxu0 0.0
    %1689 = vmatprep.subr.mxu0 0.0
    %1690 = vmatpush1.msra.mxu0 0.0
    %1691 = vmatprep.subr.mxu0 0.0
    %1692 = vmatpush1.msra.mxu0 0.0
    %1693 = vmatprep.subr.mxu0 0.0
    %1694 = vmatpush1.msra.mxu0 0.0
    %1695 = vmatprep.subr.mxu0 0.0
    %1696 = vmatpush1.msra.mxu0 0.0
    %1697 = vmatprep.subr.mxu0 0.0
    %1698 = vmatpush1.msra.mxu0 0.0
    %1699 = vmatprep.subr.mxu0 0.0
    %1700 = vmatpush1.msra.mxu0 0.0
    %1701 = vmatprep.subr.mxu0 0.0
    %1702 = vmatpush1.msra.mxu0 0.0
    %1703 = vmatprep.subr.mxu0 0.0
    %1704 = vmatpush1.msra.mxu0 0.0
    %1705 = vmatprep.subr.mxu0 0.0
    %1706 = vmatpush1.msra.mxu0 0.0
    %1707 = vmatprep.subr.mxu0 0.0
    %1708 = vmatpush1.msra.mxu0 0.0
    %1709 = vmatprep.subr.mxu0 0.0
    %1710 = vmatpush1.msra.mxu0 0.0
    %1711 = vmatprep.subr.mxu0 0.0
    %1712 = vmatpush1.msra.mxu0 0.0
    %1713 = vmatprep.subr.mxu0 0.0
    %1714 = vmatpush1.msra.mxu0 0.0
    %1715 = vmatprep.subr.mxu0 0.0
    %1716 = vmatpush1.msra.mxu0 0.0
    %1717 = vmatprep.subr.mxu0 0.0
    %1718 = vmatpush1.msra.mxu0 0.0
    %1719 = vmatprep.mubr.f32.mxu0 0.0
    %1720 = vmatmul.mubr.f32.gmra.mrb[0].mxu0 %v1653
    %v1721 = vpop.f32.mrb[0].mxu0
    %v1722 = vadd.f32 0.0, %v1721
    %v1723 = vpop.f32.mrb[0].mxu0
    %1724 = vdwg.mxu0
    %v1725 = vadd.f32 %v625, %v1722
    %v1726 = vmax.f32 %v1725, 0.0
    %v1727 = vld [vmem:[%s15] sm:$0xf]
    %v1728 = vld [vmem:[%s16] sm:$0xf]
    %v1729 = vmul.f32 %v647, %v1727
    %vm1730 = vcmask 125952
    %v1731 = vsel %vm1730, %v1729, 0.0
    %1732 = vadd.xlane.f32.xlu0 %v1731
    %v1733 = vpop.xlane.xlu0 %1732
    %v1734 = vmul.f32 %v1726, %v1728
    %v1735 = vsel %vm1730, %v1734, 0.0
    %1736 = vadd.xlane.f32.xlu0 %v1735
    %v1737 = vpop.xlane.xlu0 %1736
    %v1738 = vadd.f32 %v1733, %v1737
    %v1740 = vrot.slane %v1727, 4
    %v1742 = vmul.f32 %v726, %v1740
    %vm1743 = vcmask 130052
    %v1744 = vsel %vm1743, %v1742, 0.0
    %1745 = vadd.xlane.f32.xlu0 %v1744
    %v1746 = vpop.xlane.xlu0 %1745
    %v1748 = vrot.slane %v1728, 4
    %v1750 = vmul.f32 %v1572, %v1748
    %v1751 = vsel %vm1743, %v1750, 0.0
    %1752 = vadd.xlane.f32.xlu0 %v1751
    %v1753 = vpop.xlane.xlu0 %1752
    %v1754 = vadd.f32 %v1746, %v1753
    %v1755 = vmul.f32 %v878, %v1727
    %v1756 = vsel %vm1730, %v1755, 0.0
    %1757 = vadd.xlane.f32.xlu0 %v1756
    %v1758 = vpop.xlane.xlu0 %1757
    %v1759 = vmul.f32 %v1418, %v1728
    %v1760 = vsel %vm1730, %v1759, 0.0
    %1761 = vadd.xlane.f32.xlu0 %v1760
    %v1762 = vpop.xlane.xlu0 %1761
    %v1763 = vadd.f32 %v1758, %v1762
    %v1764 = vmul.f32 %v1034, %v1740
    %v1765 = vsel %vm1743, %v1764, 0.0
    %1766 = vadd.xlane.f32.xlu0 %v1765
    %v1767 = vpop.xlane.xlu0 %1766
    %v1768 = vmul.f32 %v1264, %v1748
    %v1769 = vsel %vm1743, %v1768, 0.0
    %1770 = vadd.xlane.f32.xlu0 %v1769
    %v1771 = vpop.xlane.xlu0 %1770
    %v1772 = vadd.f32 %v1767, %v1771
    %v1773 = vmul.f32 %v1186, %v1727
    %v1774 = vsel %vm1730, %v1773, 0.0
    %1775 = vadd.xlane.f32.xlu0 %v1774
    %v1776 = vpop.xlane.xlu0 %1775
    %v1777 = vmul.f32 %v1110, %v1728
    %v1778 = vsel %vm1730, %v1777, 0.0
    %1779 = vadd.xlane.f32.xlu0 %v1778
    %v1780 = vpop.xlane.xlu0 %1779
    %v1781 = vadd.f32 %v1776, %v1780
    %v1782 = vmul.f32 %v1342, %v1740
    %v1783 = vsel %vm1743, %v1782, 0.0
    %1784 = vadd.xlane.f32.xlu0 %v1783
    %v1785 = vpop.xlane.xlu0 %1784
    %v1786 = vmul.f32 %v956, %v1748
    %v1787 = vsel %vm1743, %v1786, 0.0
    %1788 = vadd.xlane.f32.xlu0 %v1787
    %v1789 = vpop.xlane.xlu0 %1788
    %v1790 = vadd.f32 %v1785, %v1789
    %v1791 = vmul.f32 %v1494, %v1727
    %v1792 = vsel %vm1730, %v1791, 0.0
    %1793 = vadd.xlane.f32.xlu0 %v1792
    %v1794 = vpop.xlane.xlu0 %1793
    %v1795 = vmul.f32 %v802, %v1728
    %v1796 = vsel %vm1730, %v1795, 0.0
    %1797 = vadd.xlane.f32.xlu0 %v1796
    %v1798 = vpop.xlane.xlu0 %1797
    %v1799 = vadd.f32 %v1794, %v1798
    %v1800 = vmul.f32 %v1650, %v1740
    %v1801 = vsel %vm1743, %v1800, 0.0
    %1802 = vadd.xlane.f32.xlu0 %v1801
    %v1803 = vpop.xlane.xlu0 %1802
    %v1804 = vmul.f32 %v648, %v1748
    %v1805 = vsel %vm1743, %v1804, 0.0
    %1806 = vadd.xlane.f32.xlu0 %v1805
    %v1807 = vpop.xlane.xlu0 %1806
    %v1808 = vadd.f32 %v1803, %v1807
    %v1810 = vrot.slane %v1754, 4
    %v1813 = vrot.slane %v1772, 4
    %v1816 = vrot.slane %v1790, 4
    %v1819 = vrot.slane %v1808, 4
    %vm1821 = vcmask 7168
    %v1822 = vsel %vm1821, %v1738, %v1810
    %vm1823 = vcmask 15360
    %v1824 = vsel %vm1823, %v1822, %v1763
    %vm1825 = vcmask 23552
    %v1826 = vsel %vm1825, %v1824, %v1813
    %vm1827 = vcmask 31744
    %v1828 = vsel %vm1827, %v1826, %v1781
    %vm1829 = vcmask 39936
    %v1830 = vsel %vm1829, %v1828, %v1816
    %vm1831 = vcmask 48128
    %v1832 = vsel %vm1831, %v1830, %v1799
    %vm1833 = vcmask 56320
    %v1834 = vsel %vm1833, %v1832, %v1819
    %1836 = vset.pattern.permute.xlu0 0
    %1837 = vperm.xlu0 %1836, %v327
    %v1838 = vpop.permute.xlu0 %1837
    %v1840 = vadd.f32 %v1838, %v1834
    %v1841 = vmax.f32 %v1840, 0.0
    %vm1842 = vcmask 60416
    %1843 = vst.msk [vmem:[#allocation14] sm:$0xf] %vm1842, %v1841
    // Predicated region
    $region102: #{tpu_custom_call.1} parent=1 // pred_check
      _
    $region103: #{tpu_custom_call.1} parent=1 // pred_check_branch
      %1845 = sbr.rel (0) target = $region105
    $region104: #{tpu_custom_call.1} parent=1 // pred_region
      %s1847 = ssub.s32 64, 64
      %1848 = vsyncadd [#allocation4], %s1847
      %s1850 = sshll.u32 [#allocation14], 4
      %s1851 = int_to_ptr.vmem [resolvable:$true] %s1850
      %1853 = dma.vmem_to_hbm [thread:$0]  %s1851, 64, %s18, [#allocation4]
    $region105: #{tpu_custom_call.1} parent=1 // pred_fallthru
      _
    // Predicated region
    $region106: #{tpu_custom_call.1} parent=1 // pred_check
      _
    $region107: #{tpu_custom_call.1} parent=1 // pred_check_branch
      %1855 = sbr.rel (0) target = $region109
    $region108: #{tpu_custom_call.1} parent=1 // pred_region
      %1856 = dma.done [#allocation4], 64
    $region109: #{tpu_custom_call.1} parent=1 // pred_fallthru
      _
    %1857 = vsyncpa [#allocation3], 1
    %1858 = vsyncpa [#allocation6], 1
    %1859 = vsyncpa [#allocation9], 1
    %1860 = vsyncpa [#allocation12], 1
    %1861 = vsyncpa [#allocation4], 1

</llo_original>
